<compile_context>
chip_gen: v6e
topology: v6e:2x2x1
jax: 0.10.0
libtpu: 0.0.40
codegen_flags: <defaults>
</compile_context>

<pallas_src>
import jax
import jax.numpy as jnp
from jax import lax
from jax.experimental import pallas as pl
from jax.experimental.pallas import tpu as pltpu

EPS = 1e-12

# Row indices inside the packed (16, H) parameter table.
_B_IMG, _G_IMG, _BT_IMG = 0, 1, 2
_B_ANG, _G_ANG, _BT_ANG = 3, 4, 5
_B_POS, _G_POS, _BT_POS = 6, 7, 8
_G_OUT, _BT_OUT = 9, 10
_PARAM_ROWS = 16  # pad to a full sublane tile


def _round_up(x, m):
    return (x + m - 1) // m * m


def _layer_norm(x, gamma, beta):
    # Two-pass BertLayerNorm (cancellation-safe): subtract mean, then square.
    mu = jnp.mean(x, axis=-1, keepdims=True)
    xc = x - mu
    var = jnp.mean(xc * xc, axis=-1, keepdims=True)
    return xc * lax.rsqrt(var + EPS) * gamma + beta


def object_embeddings_kernel(feat_ref, ap_ref, type_ref, nav_ref,
                             wi_ref, wap_ref, pt_ref, out_ref):
    f32 = jnp.float32
    H = out_ref.shape[-1]
    pt = pt_ref[...]                      # (16, H) packed biases / LN params, f32

    def row(i):                           # static (1, H) slice of the param table
        return pt[i:i + 1, :]

    # Image projection: cast f32 feat tile -> bf16 in-kernel (VPU filler under the
    # MXU / DMA), accumulate in f32 on the MXU.
    feat = feat_ref[...].astype(wi_ref.dtype)
    img = jnp.dot(feat, wi_ref[...], preferred_element_type=f32) + row(_B_IMG)
    img = _layer_norm(img, row(_G_IMG), row(_BT_IMG))

    # Angle|position projections: one block-diagonal (F_ang+5, 2H) bf16 weight,
    # a single MXU pass, then split the result into the two H-wide halves.
    ap_proj = jnp.dot(ap_ref[...], wap_ref[...], preferred_element_type=f32)
    ang = _layer_norm(ap_proj[:, :H] + row(_B_ANG), row(_G_ANG), row(_BT_ANG))
    pos = _layer_norm(ap_proj[:, H:] + row(_B_POS), row(_G_POS), row(_BT_POS))

    # type + nav_type embeddings added in-kernel (free VPU work, no pre-sum pass).
    emb = img + ang + pos + type_ref[...] + nav_ref[...]
    emb = _layer_norm(emb, row(_G_OUT), row(_BT_OUT))

    # TODO(synk): training-mode dropout (pltpu.prng_random_bits mask) not implemented;
    # eval/inference-mode dropout is identity.
    out_ref[...] = emb.astype(out_ref.dtype)


def prepare_params(params, matmul_dtype=jnp.bfloat16):
    """Precompute kernel-ready weights ONCE (not per call)."""
    H = params["w_img"].shape[-1]
    F_ang = params["w_ang"].shape[0]
    F_pos = params["w_pos"].shape[0]

    w_img = params["w_img"].astype(matmul_dtype)

    # Block-diagonal (F_ang+F_pos, 2H): a single dot on the concatenated (ang|pos)
    # input stream produces both projections side by side.
    z = lambda r, c: jnp.zeros((r, c), matmul_dtype)
    w_ap = jnp.concatenate(
        [jnp.concatenate([params["w_ang"].astype(matmul_dtype), z(F_ang, H)], axis=1),
         jnp.concatenate([z(F_pos, H), params["w_pos"].astype(matmul_dtype)], axis=1)],
        axis=0)

    # Pack all (1, H) bias / gamma / beta vectors into one sublane-aligned table.
    rows = [params[k] for k in (
        "b_img", "g_img", "bt_img", "b_ang", "g_ang", "bt_ang",
        "b_pos", "g_pos", "bt_pos", "g_out", "bt_out")]
    table = jnp.concatenate(
        rows + [jnp.zeros((_PARAM_ROWS - len(rows), H), jnp.float32)], axis=0)

    return dict(w_img=w_img, w_ap=w_ap, param_table=table)


def object_embeddings(obj_feat, obj_ang, obj_pos, type_emb, nav_type_emb, prepared,
                      *, tile_r=None, out_dtype=jnp.float32):
    """obj_feat: (B, N, F_obj) f32, obj_ang: (B, N, F_ang), obj_pos: (B, N, 5),
    type_emb / nav_type_emb: (B, N, H). Returns (B, N, H) in out_dtype
    (pass jnp.bfloat16 if the downstream transformer consumes bf16)."""
    B, N, F_obj = obj_feat.shape
    F_ang = obj_ang.shape[-1]
    F_pos = obj_pos.shape[-1]
    F_ap = F_ang + F_pos
    H = type_emb.shape[-1]
    R = B * N

    if tile_r is None:
        # >=4 grid steps when possible (feeds both v7x TensorCores), >=128 rows per
        # step (amortize ~0.35us/step pipeline overhead), capped at 512 so the
        # double-buffered f32 feat tile fits v7x's 64 MiB VMEM.
        tile_r = min(512, max(128, _round_up(pl.cdiv(R, 4), 128)))
    tile_r = min(tile_r, _round_up(R, 16))   # small-R path: bf16-sublane aligned

    # Reshapes below are free (contiguous views); no padding, no pre-sum, no cast pass.
    feat2 = obj_feat.reshape(R, F_obj)                       # stays f32; cast in-kernel
    ap2 = jnp.concatenate(
        [obj_ang.reshape(R, F_ang), obj_pos.reshape(R, F_pos)],
        axis=-1).astype(prepared["w_ap"].dtype)              # tiny (R, F_ang+5) stream
    type2 = type_emb.reshape(R, H)
    nav2 = nav_type_emb.reshape(R, H)

    args = (feat2, ap2, type2, nav2,
            prepared["w_img"], prepared["w_ap"], prepared["param_table"])

    def run(single_buffer_weights):
        def rows(cols):
            return pl.BlockSpec((tile_r, cols), lambda i: (i, 0))

        def resident(shape):
            if single_buffer_weights:
                return pl.BlockSpec(shape, lambda i: (0, 0),
                                    pipeline_mode=pl.Buffered(1))
            return pl.BlockSpec(shape, lambda i: (0, 0))

        return pl.pallas_call(
            object_embeddings_kernel,
            grid=(pl.cdiv(R, tile_r),),                      # ragged last block OK
            in_specs=[
                rows(F_obj),                   # obj features (f32)
                rows(F_ap),                    # ang|pos concat (bf16)
                rows(H),                       # type embeddings
                rows(H),                       # nav_type embeddings
                resident((F_obj, H)),          # w_img (bf16), VMEM-resident
                resident((F_ap, 2 * H)),       # block-diag w_ang|w_pos (bf16)
                resident((_PARAM_ROWS, H)),    # packed biases / LN params (f32)
            ],
            out_specs=pl.BlockSpec((tile_r, H), lambda i: (i, 0)),
            out_shape=jax.ShapeDtypeStruct((R, H), out_dtype),
            compiler_params=pltpu.CompilerParams(
                dimension_semantics=("parallel",),
                vmem_limit_bytes=48 * 1024 * 1024,
            ),
        )(*args)

    try:
        out = run(single_buffer_weights=True)
    except Exception:
        # Fallback if this JAX/Mosaic build rejects pipeline_mode on grid BlockSpecs:
        # identical semantics, just default double-buffered resident weights.
        out = run(single_buffer_weights=False)

    return out.reshape(B, N, H)


def init_params(key, obj_feat_size, angle_feat_size, hidden_size):
    ks = jax.random.split(key, 6)
    scale = 0.02

    def lin(k, fin, fout):
        kw, kb = jax.random.split(k)
        w = scale * jax.random.normal(kw, (fin, fout), jnp.float32)
        b = scale * jax.random.normal(kb, (1, fout), jnp.float32)
        return w, b

    w_img, b_img = lin(ks[0], obj_feat_size, hidden_size)
    w_ang, b_ang = lin(ks[1], angle_feat_size, hidden_size)
    w_pos, b_pos = lin(ks[2], 5, hidden_size)

    def ln_params(k):
        gamma = jnp.ones((1, hidden_size), jnp.float32)
        beta = scale * jax.random.normal(k, (1, hidden_size), jnp.float32)
        return gamma, beta

    g_img, bt_img = ln_params(ks[3])
    g_ang, bt_ang = ln_params(ks[4])
    g_pos, bt_pos = ln_params(ks[5])
    g_out = jnp.ones((1, hidden_size), jnp.float32)
    bt_out = jnp.zeros((1, hidden_size), jnp.float32)

    return dict(
        w_img=w_img, b_img=b_img, g_img=g_img, bt_img=bt_img,
        w_ang=w_ang, b_ang=b_ang, g_ang=g_ang, bt_ang=bt_ang,
        w_pos=w_pos, b_pos=b_pos, g_pos=g_pos, bt_pos=bt_pos,
        g_out=g_out, bt_out=bt_out,
    )


def reference(obj_feat, obj_ang, obj_pos, type_emb, nav_type_emb, p,
              matmul_dtype=jnp.float32):
    def ln(x, g, b):
        mu = jnp.mean(x, axis=-1, keepdims=True)
        var = jnp.mean(jnp.square(x - mu), axis=-1, keepdims=True)
        return (x - mu) * lax.rsqrt(var + EPS) * g + b

    def proj(x, w, b):
        return jnp.dot(x.astype(matmul_dtype), w.astype(matmul_dtype),
                       preferred_element_type=jnp.float32) + b

    img = ln(proj(obj_feat, p["w_img"], p["b_img"]), p["g_img"], p["bt_img"])
    ang = ln(proj(obj_ang, p["w_ang"], p["b_ang"]), p["g_ang"], p["bt_ang"])
    pos = ln(proj(obj_pos, p["w_pos"], p["b_pos"]), p["g_pos"], p["bt_pos"])
    emb = img + ang + pos + nav_type_emb + type_emb
    return ln(emb, p["g_out"], p["bt_out"])


if __name__ == "__main__":
    key = jax.random.PRNGKey(0)
    B, N = 2, 9                 # R = 18: exercises the ragged (non-divisible) last block
    OBJ_FEAT, ANG_FEAT, H = 32, 8, 32

    k_feat, k_ang, k_pos, k_type, k_nav, k_par = jax.random.split(key, 6)
    obj_feat = jax.random.normal(k_feat, (B, N, OBJ_FEAT), jnp.float32)
    obj_ang = jax.random.normal(k_ang, (B, N, ANG_FEAT), jnp.float32)
    obj_pos = jax.random.normal(k_pos, (B, N, 5), jnp.float32)
    type_emb = jax.random.normal(k_type, (B, N, H), jnp.float32)
    nav_type_emb = jax.random.normal(k_nav, (B, N, H), jnp.float32)

    params = init_params(k_par, OBJ_FEAT, ANG_FEAT, H)
    prepared = prepare_params(params, matmul_dtype=jnp.bfloat16)

    out = object_embeddings(obj_feat, obj_ang, obj_pos, type_emb, nav_type_emb,
                            prepared)
    out = jax.block_until_ready(out)
    assert out.shape == (B, N, H)
    assert bool(jnp.all(jnp.isfinite(out)))

    # Tight check against a reference using the same bf16 projection precision.
    ref_bf = reference(obj_feat, obj_ang, obj_pos, type_emb, nav_type_emb, params,
                       matmul_dtype=jnp.bfloat16)
    assert jnp.allclose(out, ref_bf, atol=2e-3, rtol=2e-3), \
        float(jnp.max(jnp.abs(out - ref_bf)))

    # Loose sanity check against the full-f32 PyTorch-equivalent reference.
    ref_f32 = reference(obj_feat, obj_ang, obj_pos, type_emb, nav_type_emb, params,
                        matmul_dtype=jnp.float32)
    assert jnp.allclose(out, ref_f32, atol=1e-1, rtol=1e-1), \
        float(jnp.max(jnp.abs(out - ref_f32)))

    print("KERNEL_OK")
</pallas_src>

<mosaic_0001>
module attributes {stable_mosaic.version = 11 : i64} {
  func.func @object_embeddings_kernel(%arg0: i32, %arg1: memref<32x32xf32, #tpu.memory_space<vmem>>, %arg2: memref<32x13xbf16, #tpu.memory_space<vmem>>, %arg3: memref<32x32xf32, #tpu.memory_space<vmem>>, %arg4: memref<32x32xf32, #tpu.memory_space<vmem>>, %arg5: memref<32x32xbf16, #tpu.memory_space<vmem>>, %arg6: memref<13x64xbf16, #tpu.memory_space<vmem>>, %arg7: memref<16x32xf32, #tpu.memory_space<vmem>>, %arg8: memref<32x32xf32, #tpu.memory_space<vmem>>) attributes {dimension_semantics = [#tpu.dimension_semantics<parallel>], iteration_bounds = array<i64: 1>, scalar_prefetch = 0 : i64, scratch_operands = 0 : i64, tpu.core_type = #tpu.core_type<tc>, window_params = [{transform_indices = @transform_0, window_bounds = array<i64: 32, 32>}, {transform_indices = @transform_1, window_bounds = array<i64: 32, 13>}, {transform_indices = @transform_2, window_bounds = array<i64: 32, 32>}, {transform_indices = @transform_3, window_bounds = array<i64: 32, 32>}, {pipeline_mode = #tpu.pipeline_mode<synchronous>, transform_indices = @transform_4, window_bounds = array<i64: 32, 32>}, {pipeline_mode = #tpu.pipeline_mode<synchronous>, transform_indices = @transform_5, window_bounds = array<i64: 13, 64>}, {pipeline_mode = #tpu.pipeline_mode<synchronous>, transform_indices = @transform_6, window_bounds = array<i64: 16, 32>}, {transform_indices = @transform_7, window_bounds = array<i64: 32, 32>}]} {
    %c0 = arith.constant 0 : index
    %c0_0 = arith.constant 0 : index
    %0 = vector.load %arg7[%c0, %c0_0] : memref<16x32xf32, #tpu.memory_space<vmem>>, vector<16x32xf32>
    %c0_1 = arith.constant 0 : index
    %c0_2 = arith.constant 0 : index
    %1 = vector.load %arg1[%c0_1, %c0_2] : memref<32x32xf32, #tpu.memory_space<vmem>>, vector<32x32xf32>
    %2 = arith.truncf %1 : vector<32x32xf32> to vector<32x32xbf16>
    %c0_3 = arith.constant 0 : index
    %c0_4 = arith.constant 0 : index
    %3 = vector.load %arg5[%c0_3, %c0_4] : memref<32x32xbf16, #tpu.memory_space<vmem>>, vector<32x32xbf16>
    %cst = arith.constant dense<0.000000e+00> : vector<32x32xf32>
    %4 = tpu.matmul %2, %3, %cst {dimension_numbers = #tpu.dot_dimension_numbers<[1], [0], [0], [1], [0, 0, 1, 1], [], []>} : vector<32x32xbf16>, vector<32x32xbf16>, vector<32x32xf32> -> vector<32x32xf32>
    %5 = vector.extract_strided_slice %0 {offsets = [0, 0], sizes = [1, 32], strides = [1, 1]} : vector<16x32xf32> to vector<1x32xf32>
    %6 = vector.broadcast %5 : vector<1x32xf32> to vector<32x32xf32>
    %7 = arith.addf %4, %6 : vector<32x32xf32>
    %8 = vector.extract_strided_slice %0 {offsets = [1, 0], sizes = [1, 32], strides = [1, 1]} : vector<16x32xf32> to vector<1x32xf32>
    %9 = vector.extract_strided_slice %0 {offsets = [2, 0], sizes = [1, 32], strides = [1, 1]} : vector<16x32xf32> to vector<1x32xf32>
    %cst_5 = arith.constant dense<0.000000e+00> : vector<32xf32>
    %10 = vector.multi_reduction <add>, %7, %cst_5 [1] : vector<32x32xf32> to vector<32xf32>
    %11 = vector.shape_cast %10 : vector<32xf32> to vector<32x1xf32>
    %cst_6 = arith.constant 3.200000e+01 : f32
    %12 = vector.broadcast %cst_6 : f32 to vector<32x1xf32>
    %13 = arith.divf %11, %12 : vector<32x1xf32>
    %14 = vector.broadcast %13 : vector<32x1xf32> to vector<32x32xf32>
    %15 = arith.subf %7, %14 : vector<32x32xf32>
    %16 = arith.mulf %15, %15 : vector<32x32xf32>
    %cst_7 = arith.constant dense<0.000000e+00> : vector<32xf32>
    %17 = vector.multi_reduction <add>, %16, %cst_7 [1] : vector<32x32xf32> to vector<32xf32>
    %18 = vector.shape_cast %17 : vector<32xf32> to vector<32x1xf32>
    %cst_8 = arith.constant 3.200000e+01 : f32
    %19 = vector.broadcast %cst_8 : f32 to vector<32x1xf32>
    %20 = arith.divf %18, %19 : vector<32x1xf32>
    %cst_9 = arith.constant 9.99999996E-13 : f32
    %21 = vector.broadcast %cst_9 : f32 to vector<32x1xf32>
    %22 = arith.addf %20, %21 : vector<32x1xf32>
    %23 = math.rsqrt %22 : vector<32x1xf32>
    %24 = vector.broadcast %23 : vector<32x1xf32> to vector<32x32xf32>
    %25 = arith.mulf %15, %24 : vector<32x32xf32>
    %26 = vector.broadcast %8 : vector<1x32xf32> to vector<32x32xf32>
    %27 = arith.mulf %25, %26 : vector<32x32xf32>
    %28 = vector.broadcast %9 : vector<1x32xf32> to vector<32x32xf32>
    %29 = arith.addf %27, %28 : vector<32x32xf32>
    %c0_10 = arith.constant 0 : index
    %c0_11 = arith.constant 0 : index
    %30 = vector.load %arg2[%c0_10, %c0_11] : memref<32x13xbf16, #tpu.memory_space<vmem>>, vector<32x13xbf16>
    %c0_12 = arith.constant 0 : index
    %c0_13 = arith.constant 0 : index
    %31 = vector.load %arg6[%c0_12, %c0_13] : memref<13x64xbf16, #tpu.memory_space<vmem>>, vector<13x64xbf16>
    %cst_14 = arith.constant dense<0.000000e+00> : vector<32x64xf32>
    %32 = tpu.matmul %30, %31, %cst_14 {dimension_numbers = #tpu.dot_dimension_numbers<[1], [0], [0], [1], [0, 0, 1, 1], [], []>} : vector<32x13xbf16>, vector<13x64xbf16>, vector<32x64xf32> -> vector<32x64xf32>
    %33 = vector.extract_strided_slice %32 {offsets = [0, 0], sizes = [32, 32], strides = [1, 1]} : vector<32x64xf32> to vector<32x32xf32>
    %34 = vector.extract_strided_slice %0 {offsets = [3, 0], sizes = [1, 32], strides = [1, 1]} : vector<16x32xf32> to vector<1x32xf32>
    %35 = vector.broadcast %34 : vector<1x32xf32> to vector<32x32xf32>
    %36 = arith.addf %33, %35 : vector<32x32xf32>
    %37 = vector.extract_strided_slice %0 {offsets = [4, 0], sizes = [1, 32], strides = [1, 1]} : vector<16x32xf32> to vector<1x32xf32>
    %38 = vector.extract_strided_slice %0 {offsets = [5, 0], sizes = [1, 32], strides = [1, 1]} : vector<16x32xf32> to vector<1x32xf32>
    %cst_15 = arith.constant dense<0.000000e+00> : vector<32xf32>
    %39 = vector.multi_reduction <add>, %36, %cst_15 [1] : vector<32x32xf32> to vector<32xf32>
    %40 = vector.shape_cast %39 : vector<32xf32> to vector<32x1xf32>
    %cst_16 = arith.constant 3.200000e+01 : f32
    %41 = vector.broadcast %cst_16 : f32 to vector<32x1xf32>
    %42 = arith.divf %40, %41 : vector<32x1xf32>
    %43 = vector.broadcast %42 : vector<32x1xf32> to vector<32x32xf32>
    %44 = arith.subf %36, %43 : vector<32x32xf32>
    %45 = arith.mulf %44, %44 : vector<32x32xf32>
    %cst_17 = arith.constant dense<0.000000e+00> : vector<32xf32>
    %46 = vector.multi_reduction <add>, %45, %cst_17 [1] : vector<32x32xf32> to vector<32xf32>
    %47 = vector.shape_cast %46 : vector<32xf32> to vector<32x1xf32>
    %cst_18 = arith.constant 3.200000e+01 : f32
    %48 = vector.broadcast %cst_18 : f32 to vector<32x1xf32>
    %49 = arith.divf %47, %48 : vector<32x1xf32>
    %cst_19 = arith.constant 9.99999996E-13 : f32
    %50 = vector.broadcast %cst_19 : f32 to vector<32x1xf32>
    %51 = arith.addf %49, %50 : vector<32x1xf32>
    %52 = math.rsqrt %51 : vector<32x1xf32>
    %53 = vector.broadcast %52 : vector<32x1xf32> to vector<32x32xf32>
    %54 = arith.mulf %44, %53 : vector<32x32xf32>
    %55 = vector.broadcast %37 : vector<1x32xf32> to vector<32x32xf32>
    %56 = arith.mulf %54, %55 : vector<32x32xf32>
    %57 = vector.broadcast %38 : vector<1x32xf32> to vector<32x32xf32>
    %58 = arith.addf %56, %57 : vector<32x32xf32>
    %59 = vector.extract_strided_slice %32 {offsets = [0, 32], sizes = [32, 32], strides = [1, 1]} : vector<32x64xf32> to vector<32x32xf32>
    %60 = vector.extract_strided_slice %0 {offsets = [6, 0], sizes = [1, 32], strides = [1, 1]} : vector<16x32xf32> to vector<1x32xf32>
    %61 = vector.broadcast %60 : vector<1x32xf32> to vector<32x32xf32>
    %62 = arith.addf %59, %61 : vector<32x32xf32>
    %63 = vector.extract_strided_slice %0 {offsets = [7, 0], sizes = [1, 32], strides = [1, 1]} : vector<16x32xf32> to vector<1x32xf32>
    %64 = vector.extract_strided_slice %0 {offsets = [8, 0], sizes = [1, 32], strides = [1, 1]} : vector<16x32xf32> to vector<1x32xf32>
    %cst_20 = arith.constant dense<0.000000e+00> : vector<32xf32>
    %65 = vector.multi_reduction <add>, %62, %cst_20 [1] : vector<32x32xf32> to vector<32xf32>
    %66 = vector.shape_cast %65 : vector<32xf32> to vector<32x1xf32>
    %cst_21 = arith.constant 3.200000e+01 : f32
    %67 = vector.broadcast %cst_21 : f32 to vector<32x1xf32>
    %68 = arith.divf %66, %67 : vector<32x1xf32>
    %69 = vector.broadcast %68 : vector<32x1xf32> to vector<32x32xf32>
    %70 = arith.subf %62, %69 : vector<32x32xf32>
    %71 = arith.mulf %70, %70 : vector<32x32xf32>
    %cst_22 = arith.constant dense<0.000000e+00> : vector<32xf32>
    %72 = vector.multi_reduction <add>, %71, %cst_22 [1] : vector<32x32xf32> to vector<32xf32>
    %73 = vector.shape_cast %72 : vector<32xf32> to vector<32x1xf32>
    %cst_23 = arith.constant 3.200000e+01 : f32
    %74 = vector.broadcast %cst_23 : f32 to vector<32x1xf32>
    %75 = arith.divf %73, %74 : vector<32x1xf32>
    %cst_24 = arith.constant 9.99999996E-13 : f32
    %76 = vector.broadcast %cst_24 : f32 to vector<32x1xf32>
    %77 = arith.addf %75, %76 : vector<32x1xf32>
    %78 = math.rsqrt %77 : vector<32x1xf32>
    %79 = vector.broadcast %78 : vector<32x1xf32> to vector<32x32xf32>
    %80 = arith.mulf %70, %79 : vector<32x32xf32>
    %81 = vector.broadcast %63 : vector<1x32xf32> to vector<32x32xf32>
    %82 = arith.mulf %80, %81 : vector<32x32xf32>
    %83 = vector.broadcast %64 : vector<1x32xf32> to vector<32x32xf32>
    %84 = arith.addf %82, %83 : vector<32x32xf32>
    %85 = arith.addf %29, %58 : vector<32x32xf32>
    %86 = arith.addf %85, %84 : vector<32x32xf32>
    %c0_25 = arith.constant 0 : index
    %c0_26 = arith.constant 0 : index
    %87 = vector.load %arg3[%c0_25, %c0_26] : memref<32x32xf32, #tpu.memory_space<vmem>>, vector<32x32xf32>
    %88 = arith.addf %86, %87 : vector<32x32xf32>
    %c0_27 = arith.constant 0 : index
    %c0_28 = arith.constant 0 : index
    %89 = vector.load %arg4[%c0_27, %c0_28] : memref<32x32xf32, #tpu.memory_space<vmem>>, vector<32x32xf32>
    %90 = arith.addf %88, %89 : vector<32x32xf32>
    %91 = vector.extract_strided_slice %0 {offsets = [9, 0], sizes = [1, 32], strides = [1, 1]} : vector<16x32xf32> to vector<1x32xf32>
    %92 = vector.extract_strided_slice %0 {offsets = [10, 0], sizes = [1, 32], strides = [1, 1]} : vector<16x32xf32> to vector<1x32xf32>
    %cst_29 = arith.constant dense<0.000000e+00> : vector<32xf32>
    %93 = vector.multi_reduction <add>, %90, %cst_29 [1] : vector<32x32xf32> to vector<32xf32>
    %94 = vector.shape_cast %93 : vector<32xf32> to vector<32x1xf32>
    %cst_30 = arith.constant 3.200000e+01 : f32
    %95 = vector.broadcast %cst_30 : f32 to vector<32x1xf32>
    %96 = arith.divf %94, %95 : vector<32x1xf32>
    %97 = vector.broadcast %96 : vector<32x1xf32> to vector<32x32xf32>
    %98 = arith.subf %90, %97 : vector<32x32xf32>
    %99 = arith.mulf %98, %98 : vector<32x32xf32>
    %cst_31 = arith.constant dense<0.000000e+00> : vector<32xf32>
    %100 = vector.multi_reduction <add>, %99, %cst_31 [1] : vector<32x32xf32> to vector<32xf32>
    %101 = vector.shape_cast %100 : vector<32xf32> to vector<32x1xf32>
    %cst_32 = arith.constant 3.200000e+01 : f32
    %102 = vector.broadcast %cst_32 : f32 to vector<32x1xf32>
    %103 = arith.divf %101, %102 : vector<32x1xf32>
    %cst_33 = arith.constant 9.99999996E-13 : f32
    %104 = vector.broadcast %cst_33 : f32 to vector<32x1xf32>
    %105 = arith.addf %103, %104 : vector<32x1xf32>
    %106 = math.rsqrt %105 : vector<32x1xf32>
    %107 = vector.broadcast %106 : vector<32x1xf32> to vector<32x32xf32>
    %108 = arith.mulf %98, %107 : vector<32x32xf32>
    %109 = vector.broadcast %91 : vector<1x32xf32> to vector<32x32xf32>
    %110 = arith.mulf %108, %109 : vector<32x32xf32>
    %111 = vector.broadcast %92 : vector<1x32xf32> to vector<32x32xf32>
    %112 = arith.addf %110, %111 : vector<32x32xf32>
    %c0_34 = arith.constant 0 : index
    %c0_35 = arith.constant 0 : index
    %113 = vector.load %arg8[%c0_34, %c0_35] : memref<32x32xf32, #tpu.memory_space<vmem>>, vector<32x32xf32>
    tpu.vector_store %arg8[%c0_34, %c0_35], %112 {strides = array<i32>} : memref<32x32xf32, #tpu.memory_space<vmem>>, vector<32x32xf32>,
    return
  }
  func.func @transform_0(%arg0: i32) -> (i32, i32) {
    %c0_i32 = arith.constant 0 : i32
    %c0_i32_0 = arith.constant 0 : i32
    return %arg0, %c0_i32 : i32, i32
  }
  func.func @transform_1(%arg0: i32) -> (i32, i32) {
    %c0_i32 = arith.constant 0 : i32
    %c0_i32_0 = arith.constant 0 : i32
    return %arg0, %c0_i32 : i32, i32
  }
  func.func @transform_2(%arg0: i32) -> (i32, i32) {
    %c0_i32 = arith.constant 0 : i32
    %c0_i32_0 = arith.constant 0 : i32
    return %arg0, %c0_i32 : i32, i32
  }
  func.func @transform_3(%arg0: i32) -> (i32, i32) {
    %c0_i32 = arith.constant 0 : i32
    %c0_i32_0 = arith.constant 0 : i32
    return %arg0, %c0_i32 : i32, i32
  }
  func.func @transform_4(%arg0: i32) -> (i32, i32) {
    %c0_i32 = arith.constant 0 : i32
    %c0_i32_0 = arith.constant 0 : i32
    %c0_i32_1 = arith.constant 0 : i32
    return %c0_i32, %c0_i32_0 : i32, i32
  }
  func.func @transform_5(%arg0: i32) -> (i32, i32) {
    %c0_i32 = arith.constant 0 : i32
    %c0_i32_0 = arith.constant 0 : i32
    %c0_i32_1 = arith.constant 0 : i32
    return %c0_i32, %c0_i32_0 : i32, i32
  }
  func.func @transform_6(%arg0: i32) -> (i32, i32) {
    %c0_i32 = arith.constant 0 : i32
    %c0_i32_0 = arith.constant 0 : i32
    %c0_i32_1 = arith.constant 0 : i32
    return %c0_i32, %c0_i32_0 : i32, i32
  }
  func.func @transform_7(%arg0: i32) -> (i32, i32) {
    %c0_i32 = arith.constant 0 : i32
    %c0_i32_0 = arith.constant 0 : i32
    return %arg0, %c0_i32 : i32, i32
  }
}

module attributes {stable_mosaic.version = 11 : i64} {
  func.func @object_embeddings_kernel(%arg0: i32, %arg1: memref<32x32xf32, #tpu.memory_space<vmem>>, %arg2: memref<32x13xbf16, #tpu.memory_space<vmem>>, %arg3: memref<32x32xf32, #tpu.memory_space<vmem>>, %arg4: memref<32x32xf32, #tpu.memory_space<vmem>>, %arg5: memref<32x32xbf16, #tpu.memory_space<vmem>>, %arg6: memref<13x64xbf16, #tpu.memory_space<vmem>>, %arg7: memref<16x32xf32, #tpu.memory_space<vmem>>, %arg8: memref<32x32xf32, #tpu.memory_space<vmem>>) attributes {dimension_semantics = [#tpu.dimension_semantics<parallel>], iteration_bounds = array<i64: 1>, scalar_prefetch = 0 : i64, scratch_operands = 0 : i64, tpu.core_type = #tpu.core_type<tc>, window_params = [{transform_indices = @transform_0, window_bounds = array<i64: 32, 32>}, {transform_indices = @transform_1, window_bounds = array<i64: 32, 13>}, {transform_indices = @transform_2, window_bounds = array<i64: 32, 32>}, {transform_indices = @transform_3, window_bounds = array<i64: 32, 32>}, {pipeline_mode = #tpu.pipeline_mode<synchronous>, transform_indices = @transform_4, window_bounds = array<i64: 32, 32>}, {pipeline_mode = #tpu.pipeline_mode<synchronous>, transform_indices = @transform_5, window_bounds = array<i64: 13, 64>}, {pipeline_mode = #tpu.pipeline_mode<synchronous>, transform_indices = @transform_6, window_bounds = array<i64: 16, 32>}, {transform_indices = @transform_7, window_bounds = array<i64: 32, 32>}]} {
    %c0 = arith.constant 0 : index
    %c0_0 = arith.constant 0 : index
    %0 = vector.load %arg7[%c0, %c0_0] : memref<16x32xf32, #tpu.memory_space<vmem>>, vector<16x32xf32>
    %c0_1 = arith.constant 0 : index
    %c0_2 = arith.constant 0 : index
    %1 = vector.load %arg1[%c0_1, %c0_2] : memref<32x32xf32, #tpu.memory_space<vmem>>, vector<32x32xf32>
    %2 = arith.truncf %1 : vector<32x32xf32> to vector<32x32xbf16>
    %c0_3 = arith.constant 0 : index
    %c0_4 = arith.constant 0 : index
    %3 = vector.load %arg5[%c0_3, %c0_4] : memref<32x32xbf16, #tpu.memory_space<vmem>>, vector<32x32xbf16>
    %cst = arith.constant dense<0.000000e+00> : vector<32x32xf32>
    %4 = tpu.matmul %2, %3, %cst {dimension_numbers = #tpu.dot_dimension_numbers<[1], [0], [0], [1], [0, 0, 1, 1], [], []>} : vector<32x32xbf16>, vector<32x32xbf16>, vector<32x32xf32> -> vector<32x32xf32>
    %5 = vector.extract_strided_slice %0 {offsets = [0, 0], sizes = [1, 32], strides = [1, 1]} : vector<16x32xf32> to vector<1x32xf32>
    %6 = vector.broadcast %5 : vector<1x32xf32> to vector<32x32xf32>
    %7 = arith.addf %4, %6 : vector<32x32xf32>
    %8 = vector.extract_strided_slice %0 {offsets = [1, 0], sizes = [1, 32], strides = [1, 1]} : vector<16x32xf32> to vector<1x32xf32>
    %9 = vector.extract_strided_slice %0 {offsets = [2, 0], sizes = [1, 32], strides = [1, 1]} : vector<16x32xf32> to vector<1x32xf32>
    %cst_5 = arith.constant dense<0.000000e+00> : vector<32xf32>
    %10 = vector.multi_reduction <add>, %7, %cst_5 [1] : vector<32x32xf32> to vector<32xf32>
    %11 = vector.shape_cast %10 : vector<32xf32> to vector<32x1xf32>
    %cst_6 = arith.constant 3.200000e+01 : f32
    %12 = vector.broadcast %cst_6 : f32 to vector<32x1xf32>
    %13 = arith.divf %11, %12 : vector<32x1xf32>
    %14 = vector.broadcast %13 : vector<32x1xf32> to vector<32x32xf32>
    %15 = arith.subf %7, %14 : vector<32x32xf32>
    %16 = arith.mulf %15, %15 : vector<32x32xf32>
    %cst_7 = arith.constant dense<0.000000e+00> : vector<32xf32>
    %17 = vector.multi_reduction <add>, %16, %cst_7 [1] : vector<32x32xf32> to vector<32xf32>
    %18 = vector.shape_cast %17 : vector<32xf32> to vector<32x1xf32>
    %cst_8 = arith.constant 3.200000e+01 : f32
    %19 = vector.broadcast %cst_8 : f32 to vector<32x1xf32>
    %20 = arith.divf %18, %19 : vector<32x1xf32>
    %cst_9 = arith.constant 9.99999996E-13 : f32
    %21 = vector.broadcast %cst_9 : f32 to vector<32x1xf32>
    %22 = arith.addf %20, %21 : vector<32x1xf32>
    %23 = math.rsqrt %22 : vector<32x1xf32>
    %24 = vector.broadcast %23 : vector<32x1xf32> to vector<32x32xf32>
    %25 = arith.mulf %15, %24 : vector<32x32xf32>
    %26 = vector.broadcast %8 : vector<1x32xf32> to vector<32x32xf32>
    %27 = arith.mulf %25, %26 : vector<32x32xf32>
    %28 = vector.broadcast %9 : vector<1x32xf32> to vector<32x32xf32>
    %29 = arith.addf %27, %28 : vector<32x32xf32>
    %c0_10 = arith.constant 0 : index
    %c0_11 = arith.constant 0 : index
    %30 = vector.load %arg2[%c0_10, %c0_11] : memref<32x13xbf16, #tpu.memory_space<vmem>>, vector<32x13xbf16>
    %c0_12 = arith.constant 0 : index
    %c0_13 = arith.constant 0 : index
    %31 = vector.load %arg6[%c0_12, %c0_13] : memref<13x64xbf16, #tpu.memory_space<vmem>>, vector<13x64xbf16>
    %cst_14 = arith.constant dense<0.000000e+00> : vector<32x64xf32>
    %32 = tpu.matmul %30, %31, %cst_14 {dimension_numbers = #tpu.dot_dimension_numbers<[1], [0], [0], [1], [0, 0, 1, 1], [], []>} : vector<32x13xbf16>, vector<13x64xbf16>, vector<32x64xf32> -> vector<32x64xf32>
    %33 = vector.extract_strided_slice %32 {offsets = [0, 0], sizes = [32, 32], strides = [1, 1]} : vector<32x64xf32> to vector<32x32xf32>
    %34 = vector.extract_strided_slice %0 {offsets = [3, 0], sizes = [1, 32], strides = [1, 1]} : vector<16x32xf32> to vector<1x32xf32>
    %35 = vector.broadcast %34 : vector<1x32xf32> to vector<32x32xf32>
    %36 = arith.addf %33, %35 : vector<32x32xf32>
    %37 = vector.extract_strided_slice %0 {offsets = [4, 0], sizes = [1, 32], strides = [1, 1]} : vector<16x32xf32> to vector<1x32xf32>
    %38 = vector.extract_strided_slice %0 {offsets = [5, 0], sizes = [1, 32], strides = [1, 1]} : vector<16x32xf32> to vector<1x32xf32>
    %cst_15 = arith.constant dense<0.000000e+00> : vector<32xf32>
    %39 = vector.multi_reduction <add>, %36, %cst_15 [1] : vector<32x32xf32> to vector<32xf32>
    %40 = vector.shape_cast %39 : vector<32xf32> to vector<32x1xf32>
    %cst_16 = arith.constant 3.200000e+01 : f32
    %41 = vector.broadcast %cst_16 : f32 to vector<32x1xf32>
    %42 = arith.divf %40, %41 : vector<32x1xf32>
    %43 = vector.broadcast %42 : vector<32x1xf32> to vector<32x32xf32>
    %44 = arith.subf %36, %43 : vector<32x32xf32>
    %45 = arith.mulf %44, %44 : vector<32x32xf32>
    %cst_17 = arith.constant dense<0.000000e+00> : vector<32xf32>
    %46 = vector.multi_reduction <add>, %45, %cst_17 [1] : vector<32x32xf32> to vector<32xf32>
    %47 = vector.shape_cast %46 : vector<32xf32> to vector<32x1xf32>
    %cst_18 = arith.constant 3.200000e+01 : f32
    %48 = vector.broadcast %cst_18 : f32 to vector<32x1xf32>
    %49 = arith.divf %47, %48 : vector<32x1xf32>
    %cst_19 = arith.constant 9.99999996E-13 : f32
    %50 = vector.broadcast %cst_19 : f32 to vector<32x1xf32>
    %51 = arith.addf %49, %50 : vector<32x1xf32>
    %52 = math.rsqrt %51 : vector<32x1xf32>
    %53 = vector.broadcast %52 : vector<32x1xf32> to vector<32x32xf32>
    %54 = arith.mulf %44, %53 : vector<32x32xf32>
    %55 = vector.broadcast %37 : vector<1x32xf32> to vector<32x32xf32>
    %56 = arith.mulf %54, %55 : vector<32x32xf32>
    %57 = vector.broadcast %38 : vector<1x32xf32> to vector<32x32xf32>
    %58 = arith.addf %56, %57 : vector<32x32xf32>
    %59 = vector.extract_strided_slice %32 {offsets = [0, 32], sizes = [32, 32], strides = [1, 1]} : vector<32x64xf32> to vector<32x32xf32>
    %60 = vector.extract_strided_slice %0 {offsets = [6, 0], sizes = [1, 32], strides = [1, 1]} : vector<16x32xf32> to vector<1x32xf32>
    %61 = vector.broadcast %60 : vector<1x32xf32> to vector<32x32xf32>
    %62 = arith.addf %59, %61 : vector<32x32xf32>
    %63 = vector.extract_strided_slice %0 {offsets = [7, 0], sizes = [1, 32], strides = [1, 1]} : vector<16x32xf32> to vector<1x32xf32>
    %64 = vector.extract_strided_slice %0 {offsets = [8, 0], sizes = [1, 32], strides = [1, 1]} : vector<16x32xf32> to vector<1x32xf32>
    %cst_20 = arith.constant dense<0.000000e+00> : vector<32xf32>
    %65 = vector.multi_reduction <add>, %62, %cst_20 [1] : vector<32x32xf32> to vector<32xf32>
    %66 = vector.shape_cast %65 : vector<32xf32> to vector<32x1xf32>
    %cst_21 = arith.constant 3.200000e+01 : f32
    %67 = vector.broadcast %cst_21 : f32 to vector<32x1xf32>
    %68 = arith.divf %66, %67 : vector<32x1xf32>
    %69 = vector.broadcast %68 : vector<32x1xf32> to vector<32x32xf32>
    %70 = arith.subf %62, %69 : vector<32x32xf32>
    %71 = arith.mulf %70, %70 : vector<32x32xf32>
    %cst_22 = arith.constant dense<0.000000e+00> : vector<32xf32>
    %72 = vector.multi_reduction <add>, %71, %cst_22 [1] : vector<32x32xf32> to vector<32xf32>
    %73 = vector.shape_cast %72 : vector<32xf32> to vector<32x1xf32>
    %cst_23 = arith.constant 3.200000e+01 : f32
    %74 = vector.broadcast %cst_23 : f32 to vector<32x1xf32>
    %75 = arith.divf %73, %74 : vector<32x1xf32>
    %cst_24 = arith.constant 9.99999996E-13 : f32
    %76 = vector.broadcast %cst_24 : f32 to vector<32x1xf32>
    %77 = arith.addf %75, %76 : vector<32x1xf32>
    %78 = math.rsqrt %77 : vector<32x1xf32>
    %79 = vector.broadcast %78 : vector<32x1xf32> to vector<32x32xf32>
    %80 = arith.mulf %70, %79 : vector<32x32xf32>
    %81 = vector.broadcast %63 : vector<1x32xf32> to vector<32x32xf32>
    %82 = arith.mulf %80, %81 : vector<32x32xf32>
    %83 = vector.broadcast %64 : vector<1x32xf32> to vector<32x32xf32>
    %84 = arith.addf %82, %83 : vector<32x32xf32>
    %85 = arith.addf %29, %58 : vector<32x32xf32>
    %86 = arith.addf %85, %84 : vector<32x32xf32>
    %c0_25 = arith.constant 0 : index
    %c0_26 = arith.constant 0 : index
    %87 = vector.load %arg3[%c0_25, %c0_26] : memref<32x32xf32, #tpu.memory_space<vmem>>, vector<32x32xf32>
    %88 = arith.addf %86, %87 : vector<32x32xf32>
    %c0_27 = arith.constant 0 : index
    %c0_28 = arith.constant 0 : index
    %89 = vector.load %arg4[%c0_27, %c0_28] : memref<32x32xf32, #tpu.memory_space<vmem>>, vector<32x32xf32>
    %90 = arith.addf %88, %89 : vector<32x32xf32>
    %91 = vector.extract_strided_slice %0 {offsets = [9, 0], sizes = [1, 32], strides = [1, 1]} : vector<16x32xf32> to vector<1x32xf32>
    %92 = vector.extract_strided_slice %0 {offsets = [10, 0], sizes = [1, 32], strides = [1, 1]} : vector<16x32xf32> to vector<1x32xf32>
    %cst_29 = arith.constant dense<0.000000e+00> : vector<32xf32>
    %93 = vector.multi_reduction <add>, %90, %cst_29 [1] : vector<32x32xf32> to vector<32xf32>
    %94 = vector.shape_cast %93 : vector<32xf32> to vector<32x1xf32>
    %cst_30 = arith.constant 3.200000e+01 : f32
    %95 = vector.broadcast %cst_30 : f32 to vector<32x1xf32>
    %96 = arith.divf %94, %95 : vector<32x1xf32>
    %97 = vector.broadcast %96 : vector<32x1xf32> to vector<32x32xf32>
    %98 = arith.subf %90, %97 : vector<32x32xf32>
    %99 = arith.mulf %98, %98 : vector<32x32xf32>
    %cst_31 = arith.constant dense<0.000000e+00> : vector<32xf32>
    %100 = vector.multi_reduction <add>, %99, %cst_31 [1] : vector<32x32xf32> to vector<32xf32>
    %101 = vector.shape_cast %100 : vector<32xf32> to vector<32x1xf32>
    %cst_32 = arith.constant 3.200000e+01 : f32
    %102 = vector.broadcast %cst_32 : f32 to vector<32x1xf32>
    %103 = arith.divf %101, %102 : vector<32x1xf32>
    %cst_33 = arith.constant 9.99999996E-13 : f32
    %104 = vector.broadcast %cst_33 : f32 to vector<32x1xf32>
    %105 = arith.addf %103, %104 : vector<32x1xf32>
    %106 = math.rsqrt %105 : vector<32x1xf32>
    %107 = vector.broadcast %106 : vector<32x1xf32> to vector<32x32xf32>
    %108 = arith.mulf %98, %107 : vector<32x32xf32>
    %109 = vector.broadcast %91 : vector<1x32xf32> to vector<32x32xf32>
    %110 = arith.mulf %108, %109 : vector<32x32xf32>
    %111 = vector.broadcast %92 : vector<1x32xf32> to vector<32x32xf32>
    %112 = arith.addf %110, %111 : vector<32x32xf32>
    %c0_34 = arith.constant 0 : index
    %c0_35 = arith.constant 0 : index
    %113 = vector.load %arg8[%c0_34, %c0_35] : memref<32x32xf32, #tpu.memory_space<vmem>>, vector<32x32xf32>
    tpu.vector_store %arg8[%c0_34, %c0_35], %112 {strides = array<i32>} : memref<32x32xf32, #tpu.memory_space<vmem>>, vector<32x32xf32>,
    return
  }
  func.func @transform_0(%arg0: i32) -> (i32, i32) {
    %c0_i32 = arith.constant 0 : i32
    %c0_i32_0 = arith.constant 0 : i32
    return %arg0, %c0_i32 : i32, i32
  }
  func.func @transform_1(%arg0: i32) -> (i32, i32) {
    %c0_i32 = arith.constant 0 : i32
    %c0_i32_0 = arith.constant 0 : i32
    return %arg0, %c0_i32 : i32, i32
  }
  func.func @transform_2(%arg0: i32) -> (i32, i32) {
    %c0_i32 = arith.constant 0 : i32
    %c0_i32_0 = arith.constant 0 : i32
    return %arg0, %c0_i32 : i32, i32
  }
  func.func @transform_3(%arg0: i32) -> (i32, i32) {
    %c0_i32 = arith.constant 0 : i32
    %c0_i32_0 = arith.constant 0 : i32
    return %arg0, %c0_i32 : i32, i32
  }
  func.func @transform_4(%arg0: i32) -> (i32, i32) {
    %c0_i32 = arith.constant 0 : i32
    %c0_i32_0 = arith.constant 0 : i32
    %c0_i32_1 = arith.constant 0 : i32
    return %c0_i32, %c0_i32_0 : i32, i32
  }
  func.func @transform_5(%arg0: i32) -> (i32, i32) {
    %c0_i32 = arith.constant 0 : i32
    %c0_i32_0 = arith.constant 0 : i32
    %c0_i32_1 = arith.constant 0 : i32
    return %c0_i32, %c0_i32_0 : i32, i32
  }
  func.func @transform_6(%arg0: i32) -> (i32, i32) {
    %c0_i32 = arith.constant 0 : i32
    %c0_i32_0 = arith.constant 0 : i32
    %c0_i32_1 = arith.constant 0 : i32
    return %c0_i32, %c0_i32_0 : i32, i32
  }
  func.func @transform_7(%arg0: i32) -> (i32, i32) {
    %c0_i32 = arith.constant 0 : i32
    %c0_i32_0 = arith.constant 0 : i32
    return %arg0, %c0_i32 : i32, i32
  }
}

</mosaic_0001>

<llo_original>
// kernel: tpu_custom_call.1
$region0: #{tpu_custom_call.1}
  #allocation0 [shape = 'u32[]', space=smem, size = 0x4, offset = 0x4, fixed_abs, tag = 'smem constant byte address 0x4 - core index']
  #allocation1 [shape = 'u32[144,128]{1,0:T(1,128)}', space=vmem, size = 0x12000, scoped, tag = 'internal scratch']
  %s0 = inlined_call_operand.hbm [shape: f32[18,32], index: 0, kind: input, shape index: {}]
  %s1 = inlined_call_operand.vmem [shape: bf16[18,13], index: 1, kind: input, shape index: {}]
  %s2 = inlined_call_operand.hbm [shape: f32[18,32], index: 2, kind: input, shape index: {}]
  %s3 = inlined_call_operand.vmem [shape: f32[18,32], index: 3, kind: input, shape index: {}]
  %s4 = inlined_call_operand.hbm [shape: bf16[32,32], index: 4, kind: input, shape index: {}]
  %s5 = inlined_call_operand.hbm [shape: bf16[13,64], index: 5, kind: input, shape index: {}]
  %s6 = inlined_call_operand.hbm [shape: f32[16,32], index: 6, kind: input, shape index: {}]
  %s7 = inlined_call_operand.hbm [shape: f32[18,32], index: 7, kind: output, shape index: {}]
  %s8 = sld [smem:[#allocation0]]
  $region58: #{tpu_custom_call.1} parent=0
    _
  %s10 = ssub.s32 1, %s8
  %s11 = scalar_select 0, %s10, %s8
  $region1: #{tpu_custom_call.1} parent=0
    #allocation2 [shape = 'u8[16384]{0}', space=vmem, size = 0x4000, scoped, tag = 'input window, operand 0, single buffered']
    #allocation3 [shape = 's32[1]{0}', space=sflag, size = 0x4, scoped, tag = 'scoped memory for tpu_custom_call.1']
    #allocation4 [shape = 's32[1]{0}', space=sflag, size = 0x4, scoped, tag = 'scoped memory for tpu_custom_call.1']
    #allocation5 [shape = 'u8[16384]{0}', space=vmem, size = 0x4000, scoped, tag = 'input window, operand 2, single buffered']
    #allocation6 [shape = 's32[1]{0}', space=sflag, size = 0x4, scoped, tag = 'scoped memory for tpu_custom_call.1']
    #allocation7 [shape = 'u8[8192]{0}', space=vmem, size = 0x2000, scoped, tag = 'input window, operand 4, single buffered']
    #allocation8 [shape = 'u8[4096]{0}', space=vmem, size = 0x1000, scoped, tag = 'input window, operand 5, single buffered']
    #allocation9 [shape = 's32[1]{0}', space=sflag, size = 0x4, scoped, tag = 'scoped memory for tpu_custom_call.1']
    #allocation10 [shape = 'u8[8192]{0}', space=vmem, size = 0x2000, scoped, tag = 'input window, operand 6, single buffered']
    #allocation11 [shape = 'u8[16384]{0}', space=vmem, size = 0x4000, scoped, tag = 'output window, operand 0, single buffered']
    %12 = vsyncpa [#allocation3], 0
    %13 = vsyncpa [#allocation6], 0
    %14 = vsyncpa [#allocation9], 0
    %15 = vsyncpa [#allocation4], 0
    // Predicated region
    $region2: #{tpu_custom_call.1} parent=1 // pred_check
      _
    $region3: #{tpu_custom_call.1} parent=1 // pred_check_branch
      %17 = sbr.rel (0) target = $region5
    $region4: #{tpu_custom_call.1} parent=1 // pred_region
      %s19 = ssub.s32 512, 384
      %20 = vsyncadd [#allocation3], %s19
      %s21 = sshll.u32 [#allocation2], 4
      %s22 = int_to_ptr.vmem [resolvable:$true] %s21
      %27 = dma.hbm_to_vmem [thread:$0]  %s0, 384, %s22, [#allocation3], 128, 128, 8
    $region5: #{tpu_custom_call.1} parent=1 // pred_fallthru
      _
    // Predicated region
    $region6: #{tpu_custom_call.1} parent=1 // pred_check
      _
    $region7: #{tpu_custom_call.1} parent=1 // pred_check_branch
      %29 = sbr.rel (0) target = $region9
    $region8: #{tpu_custom_call.1} parent=1 // pred_region
      _
    $region9: #{tpu_custom_call.1} parent=1 // pred_fallthru
      _
    // Predicated region
    $region10: #{tpu_custom_call.1} parent=1 // pred_check
      _
    $region11: #{tpu_custom_call.1} parent=1 // pred_check_branch
      %31 = sbr.rel (0) target = $region13
    $region12: #{tpu_custom_call.1} parent=1 // pred_region
      %s33 = ssub.s32 512, 384
      %34 = vsyncadd [#allocation6], %s33
      %s35 = sshll.u32 [#allocation5], 4
      %s36 = int_to_ptr.vmem [resolvable:$true] %s35
      %41 = dma.hbm_to_vmem [thread:$0]  %s2, 384, %s36, [#allocation6], 128, 128, 8
    $region13: #{tpu_custom_call.1} parent=1 // pred_fallthru
      _
    // Predicated region
    $region14: #{tpu_custom_call.1} parent=1 // pred_check
      _
    $region15: #{tpu_custom_call.1} parent=1 // pred_check_branch
      %43 = sbr.rel (0) target = $region17
    $region16: #{tpu_custom_call.1} parent=1 // pred_region
      _
    $region17: #{tpu_custom_call.1} parent=1 // pred_fallthru
      _
    // Predicated region
    $region18: #{tpu_custom_call.1} parent=1 // pred_check
      _
    $region19: #{tpu_custom_call.1} parent=1 // pred_check_branch
      %45 = sbr.rel (0) target = $region21
    $region20: #{tpu_custom_call.1} parent=1 // pred_region
      %s47 = ssub.s32 256, 256
      %48 = vsyncadd [#allocation6], %s47
      %s49 = sshll.u32 [#allocation7], 4
      %s50 = int_to_ptr.vmem [resolvable:$true] %s49
      %55 = dma.hbm_to_vmem [thread:$0]  %s4, 256, %s50, [#allocation6], 64, 64, 4
    $region21: #{tpu_custom_call.1} parent=1 // pred_fallthru
      _
    // Predicated region
    $region22: #{tpu_custom_call.1} parent=1 // pred_check
      _
    $region23: #{tpu_custom_call.1} parent=1 // pred_check_branch
      %57 = sbr.rel (0) target = $region25
    $region24: #{tpu_custom_call.1} parent=1 // pred_region
      %s59 = ssub.s32 128, 128
      %60 = vsyncadd [#allocation9], %s59
      %s61 = sshll.u32 [#allocation8], 4
      %s62 = int_to_ptr.vmem [resolvable:$true] %s61
      %67 = dma.hbm_to_vmem [thread:$0]  %s5, 128, %s62, [#allocation9], 64, 64, 4
    $region25: #{tpu_custom_call.1} parent=1 // pred_fallthru
      _
    // Predicated region
    $region26: #{tpu_custom_call.1} parent=1 // pred_check
      _
    $region27: #{tpu_custom_call.1} parent=1 // pred_check_branch
      %69 = sbr.rel (0) target = $region29
    $region28: #{tpu_custom_call.1} parent=1 // pred_region
      %s71 = ssub.s32 256, 256
      %72 = vsyncadd [#allocation9], %s71
      %s73 = sshll.u32 [#allocation10], 4
      %s74 = int_to_ptr.vmem [resolvable:$true] %s73
      %79 = dma.hbm_to_vmem [thread:$0]  %s6, 256, %s74, [#allocation9], 128, 128, 8
    $region29: #{tpu_custom_call.1} parent=1 // pred_fallthru
      _
    // Predicated region
    $region30: #{tpu_custom_call.1} parent=1 // pred_check
      _
    $region31: #{tpu_custom_call.1} parent=1 // pred_check_branch
      %81 = sbr.rel (0) target = $region33
    $region32: #{tpu_custom_call.1} parent=1 // pred_region
      %82 = dma.done [#allocation3], 512
    $region33: #{tpu_custom_call.1} parent=1 // pred_fallthru
      _
    // Predicated region
    $region34: #{tpu_custom_call.1} parent=1 // pred_check
      _
    $region35: #{tpu_custom_call.1} parent=1 // pred_check_branch
      %84 = sbr.rel (0) target = $region37
    $region36: #{tpu_custom_call.1} parent=1 // pred_region
      %85 = dma.done [#allocation6], 512
    $region37: #{tpu_custom_call.1} parent=1 // pred_fallthru
      _
    // Predicated region
    $region38: #{tpu_custom_call.1} parent=1 // pred_check
      _
    $region39: #{tpu_custom_call.1} parent=1 // pred_check_branch
      %87 = sbr.rel (0) target = $region41
    $region40: #{tpu_custom_call.1} parent=1 // pred_region
      %88 = dma.done [#allocation6], 256
    $region41: #{tpu_custom_call.1} parent=1 // pred_fallthru
      _
    // Predicated region
    $region42: #{tpu_custom_call.1} parent=1 // pred_check
      _
    $region43: #{tpu_custom_call.1} parent=1 // pred_check_branch
      %90 = sbr.rel (0) target = $region45
    $region44: #{tpu_custom_call.1} parent=1 // pred_region
      %91 = dma.done [#allocation9], 128
    $region45: #{tpu_custom_call.1} parent=1 // pred_fallthru
      _
    // Predicated region
    $region46: #{tpu_custom_call.1} parent=1 // pred_check
      _
    $region47: #{tpu_custom_call.1} parent=1 // pred_check_branch
      %93 = sbr.rel (0) target = $region49
    $region48: #{tpu_custom_call.1} parent=1 // pred_region
      %94 = dma.done [#allocation9], 256
    $region49: #{tpu_custom_call.1} parent=1 // pred_fallthru
      _
    %v96 = vld [vmem:[#allocation10] sm:$0xff]
    %v97 = vld [vmem:[#allocation10 + $0x8] sm:$0xff]
    %v98 = vld [vmem:[#allocation2] sm:$0xff]
    %v99 = vld [vmem:[#allocation2 + $0x8] sm:$0xff]
    %v100 = vld [vmem:[#allocation2 + $0x10] sm:$0xff]
    %v101 = vld [vmem:[#allocation2 + $0x18] sm:$0xff]
    %v102 = vpack.c.bf16 %v99, %v98
    %v103 = vpack.c.bf16 %v101, %v100
    %v104 = vld [vmem:[#allocation7] sm:$0xf]
    %v105 = vld [vmem:[#allocation7 + $0x4] sm:$0xf]
    %v106 = vld [vmem:[#allocation7 + $0x8] sm:$0xf]
    %v107 = vld [vmem:[#allocation7 + $0xc] sm:$0xf]
    %v108 = vlaneseq
    %v109 = vshrl.u32 %v108, 7
    %v110 = vsub.s32 0, %v109
    %v111 = vrot.slane %v96, %v110
    %v116 = vunpack.c.l.b16 %v104
    %v117 = vunpack.c.l.b16 %v105
    %v118 = vunpack.c.l.b16 %v106
    %v119 = vunpack.c.l.b16 %v107
    %v120 = vpack.c.b16 %v117, %v116
    %v121 = vpack.c.b16 %v119, %v118
    %vm124 = vcmask 261120
    %v126 = vsel %vm124, %v102, 0
    %v129 = vsel %vm124, %v103, 0
    %131 = vmatprep.subr.bf16.mxu0 0
    %132 = vmatpush1.bf16.msra.mxu0 0
    %133 = vmatprep.subr.bf16.mxu0 0
    %134 = vmatpush1.bf16.msra.mxu0 0
    %135 = vmatprep.subr.bf16.mxu0 0
    %136 = vmatpush1.bf16.msra.mxu0 0
    %137 = vmatprep.subr.bf16.mxu0 0
    %138 = vmatpush1.bf16.msra.mxu0 0
    %139 = vmatprep.subr.bf16.mxu0 0
    %140 = vmatpush1.bf16.msra.mxu0 0
    %141 = vmatprep.subr.bf16.mxu0 0
    %142 = vmatpush1.bf16.msra.mxu0 0
    %143 = vmatprep.subr.bf16.mxu0 0
    %144 = vmatpush1.bf16.msra.mxu0 %v121
    %145 = vmatprep.subr.bf16.mxu0 0
    %146 = vmatpush1.bf16.msra.mxu0 %v120
    %147 = vmatprep.subr.bf16.mxu0 0
    %148 = vmatpush2.bf16.msra.mxu0 0
    %149 = vmatprep.subr.bf16.mxu0 0
    %150 = vmatpush2.bf16.msra.mxu0 0
    %151 = vmatprep.subr.bf16.mxu0 0
    %152 = vmatpush2.bf16.msra.mxu0 0
    %153 = vmatprep.subr.bf16.mxu0 0
    %154 = vmatpush2.bf16.msra.mxu0 0
    %155 = vmatprep.subr.bf16.mxu0 0
    %156 = vmatpush2.bf16.msra.mxu0 0
    %157 = vmatprep.subr.bf16.mxu0 0
    %158 = vmatpush2.bf16.msra.mxu0 0
    %159 = vmatprep.subr.bf16.mxu0 0
    %160 = vmatpush2.bf16.msra.mxu0 0
    %161 = vmatprep.subr.bf16.mxu0 0
    %162 = vmatpush2.bf16.msra.mxu0 0
    %163 = vmatprep.mubr.bf16.mxu0 0
    %164 = vmatmul.mubr.bf16.gmra.mxu0 %v126
    %v165 = vpop.f32.mrf.mxu0
    %v166 = vadd.f32 %v111, %v165
    %v167 = vpop.f32.mrf.mxu0
    %v168 = vpop.f32.mrf.mxu0
    %v169 = vadd.f32 %v111, %v168
    %v170 = vpop.f32.mrf.mxu0
    %171 = vmatprep.mubr.bf16.mxu0 0
    %172 = vmatmul.mubr.bf16.gmra.mxu0 %v129
    %v173 = vpop.f32.mrf.mxu0
    %v174 = vadd.f32 %v111, %v173
    %v175 = vpop.f32.mrf.mxu0
    %v176 = vpop.f32.mrf.mxu0
    %v177 = vadd.f32 %v111, %v176
    %v178 = vpop.f32.mrf.mxu0
    %179 = vdwg.mxu0
    %v180 = vsel %vm124, %v166, 0.0
    %181 = vadd.xlane.f32.xlu0 %v180
    %v182 = vpop.xlane.xlu0 %181
    %v183 = vsel %vm124, %v169, 0.0
    %184 = vadd.xlane.f32.xlu0 %v183
    %v185 = vpop.xlane.xlu0 %184
    %v186 = vsel %vm124, %v174, 0.0
    %187 = vadd.xlane.f32.xlu0 %v186
    %v188 = vpop.xlane.xlu0 %187
    %v189 = vsel %vm124, %v177, 0.0
    %190 = vadd.xlane.f32.xlu0 %v189
    %v191 = vpop.xlane.xlu0 %190
    %v192 = vrcp.pop 32.0
    %v193 = vmul.f32 %v182, %v192
    %v194 = vmul.f32 %v185, %v192
    %v195 = vmul.f32 %v188, %v192
    %v196 = vmul.f32 %v191, %v192
    %v197 = vsub.f32 %v166, %v193
    %v198 = vsub.f32 %v169, %v194
    %v199 = vsub.f32 %v174, %v195
    %v200 = vsub.f32 %v177, %v196
    %v201 = vmul.f32 %v197, %v197
    %v202 = vmul.f32 %v198, %v198
    %v203 = vmul.f32 %v199, %v199
    %v204 = vmul.f32 %v200, %v200
    %v205 = vsel %vm124, %v201, 0.0
    %206 = vadd.xlane.f32.xlu0 %v205
    %v207 = vpop.xlane.xlu0 %206
    %v208 = vsel %vm124, %v202, 0.0
    %209 = vadd.xlane.f32.xlu0 %v208
    %v210 = vpop.xlane.xlu0 %209
    %v211 = vsel %vm124, %v203, 0.0
    %212 = vadd.xlane.f32.xlu0 %v211
    %v213 = vpop.xlane.xlu0 %212
    %v214 = vsel %vm124, %v204, 0.0
    %215 = vadd.xlane.f32.xlu0 %v214
    %v216 = vpop.xlane.xlu0 %215
    %v217 = vmul.f32 %v207, %v192
    %v218 = vmul.f32 %v210, %v192
    %v219 = vmul.f32 %v213, %v192
    %v220 = vmul.f32 %v216, %v192
    %v221 = vadd.f32 %v217, 1e-12
    %v222 = vadd.f32 %v218, 1e-12
    %v223 = vadd.f32 %v219, 1e-12
    %v224 = vadd.f32 %v220, 1e-12
    %v225 = vrsqrt.pop %v221
    %v226 = vrsqrt.pop %v222
    %v227 = vrsqrt.pop %v223
    %v228 = vrsqrt.pop %v224
    %v229 = vmul.f32 %v197, %v225
    %v230 = vmul.f32 %v198, %v226
    %v231 = vmul.f32 %v199, %v227
    %v232 = vmul.f32 %v200, %v228
    %v233 = vlaneseq
    %v234 = vshrl.u32 %v233, 7
    %v235 = vsub.s32 1, %v234
    %v236 = vrot.slane %v96, %v235
    %v237 = vmul.f32 %v229, %v236
    %v238 = vmul.f32 %v230, %v236
    %v239 = vmul.f32 %v231, %v236
    %v240 = vmul.f32 %v232, %v236
    %v241 = vlaneseq
    %v242 = vshrl.u32 %v241, 7
    %v243 = vsub.s32 2, %v242
    %v244 = vrot.slane %v96, %v243
    %v245 = vadd.f32 %v237, %v244
    %v246 = vadd.f32 %v238, %v244
    %v247 = vadd.f32 %v239, %v244
    %v248 = vadd.f32 %v240, %v244
    %v249 = vld [vmem:[%s1] sm:$0xf]
    %v250 = vld [vmem:[%s1 + $0x4] sm:$0xf]
    %v251 = vld [vmem:[%s1 + $0x8] sm:$0xf]
    %v252 = vld [vmem:[%s1 + $0xc] sm:$0xf]
    %v253 = vld [vmem:[#allocation8] sm:$0xf]
    %v254 = vld [vmem:[#allocation8 + $0x4] sm:$0x7]
    %v259 = vunpack.c.l.b16 %v249
    %v260 = vunpack.c.l.b16 %v250
    %v261 = vunpack.c.l.b16 %v251
    %v262 = vunpack.c.l.b16 %v252
    %v263 = vpack.c.b16 %v260, %v259
    %v264 = vpack.c.b16 %v262, %v261
    %v267 = vunpack.c.l.b16 %v253
    %v268 = vunpack.c.l.b16 %v254
    %v269 = vpack.c.b16 %v268, %v267
    %vm270 = vcmask 105472
    %v272 = vsel %vm270, %v263, 0
    %v275 = vsel %vm270, %v264, 0
    %vm277 = vcmask 1045504
    %vm278 = vcmask 1046528
    %v279 = vsel %vm277, 4294967295, 65535
    %v280 = vsel %vm278, %v279, 0
    %v282 = vand.u32 %v269, %v280
    %284 = vmatprep.subr.bf16.mxu0 0
    %285 = vmatpush1.bf16.msra.mxu0 0
    %286 = vmatprep.subr.bf16.mxu0 0
    %287 = vmatpush1.bf16.msra.mxu0 0
    %288 = vmatprep.subr.bf16.mxu0 0
    %289 = vmatpush1.bf16.msra.mxu0 0
    %290 = vmatprep.subr.bf16.mxu0 0
    %291 = vmatpush1.bf16.msra.mxu0 0
    %292 = vmatprep.subr.bf16.mxu0 0
    %293 = vmatpush1.bf16.msra.mxu0 0
    %294 = vmatprep.subr.bf16.mxu0 0
    %295 = vmatpush1.bf16.msra.mxu0 0
    %296 = vmatprep.subr.bf16.mxu0 0
    %297 = vmatpush1.bf16.msra.mxu0 0
    %298 = vmatprep.subr.bf16.mxu0 0
    %299 = vmatpush1.bf16.msra.mxu0 %v282
    %300 = vmatprep.subr.bf16.mxu0 0
    %301 = vmatpush2.bf16.msra.mxu0 0
    %302 = vmatprep.subr.bf16.mxu0 0
    %303 = vmatpush2.bf16.msra.mxu0 0
    %304 = vmatprep.subr.bf16.mxu0 0
    %305 = vmatpush2.bf16.msra.mxu0 0
    %306 = vmatprep.subr.bf16.mxu0 0
    %307 = vmatpush2.bf16.msra.mxu0 0
    %308 = vmatprep.subr.bf16.mxu0 0
    %309 = vmatpush2.bf16.msra.mxu0 0
    %310 = vmatprep.subr.bf16.mxu0 0
    %311 = vmatpush2.bf16.msra.mxu0 0
    %312 = vmatprep.subr.bf16.mxu0 0
    %313 = vmatpush2.bf16.msra.mxu0 0
    %314 = vmatprep.subr.bf16.mxu0 0
    %315 = vmatpush2.bf16.msra.mxu0 0
    %316 = vmatprep.mubr.bf16.mxu0 0
    %317 = vmatmul.mubr.bf16.gmra.mxu0 %v272
    %v318 = vpop.f32.mrf.mxu0
    %v319 = vadd.f32 0.0, %v318
    %v320 = vpop.f32.mrf.mxu0
    %v321 = vpop.f32.mrf.mxu0
    %v322 = vadd.f32 0.0, %v321
    %v323 = vpop.f32.mrf.mxu0
    %324 = vmatprep.mubr.bf16.mxu0 0
    %325 = vmatmul.mubr.bf16.gmra.mxu0 %v275
    %v326 = vpop.f32.mrf.mxu0
    %v327 = vadd.f32 0.0, %v326
    %v328 = vpop.f32.mrf.mxu0
    %v329 = vpop.f32.mrf.mxu0
    %v330 = vadd.f32 0.0, %v329
    %v331 = vpop.f32.mrf.mxu0
    %332 = vdwg.mxu0
    %v333 = vlaneseq
    %v334 = vshrl.u32 %v333, 7
    %v335 = vsub.s32 3, %v334
    %v336 = vrot.slane %v96, %v335
    %v337 = vadd.f32 %v319, %v336
    %v338 = vadd.f32 %v322, %v336
    %v339 = vadd.f32 %v327, %v336
    %v340 = vadd.f32 %v330, %v336
    %v341 = vsel %vm124, %v337, 0.0
    %342 = vadd.xlane.f32.xlu0 %v341
    %v343 = vpop.xlane.xlu0 %342
    %v344 = vsel %vm124, %v338, 0.0
    %345 = vadd.xlane.f32.xlu0 %v344
    %v346 = vpop.xlane.xlu0 %345
    %v347 = vsel %vm124, %v339, 0.0
    %348 = vadd.xlane.f32.xlu0 %v347
    %v349 = vpop.xlane.xlu0 %348
    %v350 = vsel %vm124, %v340, 0.0
    %351 = vadd.xlane.f32.xlu0 %v350
    %v352 = vpop.xlane.xlu0 %351
    %v353 = vmul.f32 %v343, %v192
    %v354 = vmul.f32 %v346, %v192
    %v355 = vmul.f32 %v349, %v192
    %v356 = vmul.f32 %v352, %v192
    %v357 = vsub.f32 %v337, %v353
    %v358 = vsub.f32 %v338, %v354
    %v359 = vsub.f32 %v339, %v355
    %v360 = vsub.f32 %v340, %v356
    %v361 = vmul.f32 %v357, %v357
    %v362 = vmul.f32 %v358, %v358
    %v363 = vmul.f32 %v359, %v359
    %v364 = vmul.f32 %v360, %v360
    %v365 = vsel %vm124, %v361, 0.0
    %366 = vadd.xlane.f32.xlu0 %v365
    %v367 = vpop.xlane.xlu0 %366
    %v368 = vsel %vm124, %v362, 0.0
    %369 = vadd.xlane.f32.xlu0 %v368
    %v370 = vpop.xlane.xlu0 %369
    %v371 = vsel %vm124, %v363, 0.0
    %372 = vadd.xlane.f32.xlu0 %v371
    %v373 = vpop.xlane.xlu0 %372
    %v374 = vsel %vm124, %v364, 0.0
    %375 = vadd.xlane.f32.xlu0 %v374
    %v376 = vpop.xlane.xlu0 %375
    %v377 = vmul.f32 %v367, %v192
    %v378 = vmul.f32 %v370, %v192
    %v379 = vmul.f32 %v373, %v192
    %v380 = vmul.f32 %v376, %v192
    %v381 = vadd.f32 %v377, 1e-12
    %v382 = vadd.f32 %v378, 1e-12
    %v383 = vadd.f32 %v379, 1e-12
    %v384 = vadd.f32 %v380, 1e-12
    %v385 = vrsqrt.pop %v381
    %v386 = vrsqrt.pop %v382
    %v387 = vrsqrt.pop %v383
    %v388 = vrsqrt.pop %v384
    %v389 = vmul.f32 %v357, %v385
    %v390 = vmul.f32 %v358, %v386
    %v391 = vmul.f32 %v359, %v387
    %v392 = vmul.f32 %v360, %v388
    %v393 = vlaneseq
    %v394 = vshrl.u32 %v393, 7
    %v395 = vsub.s32 4, %v394
    %v396 = vrot.slane %v96, %v395
    %v397 = vmul.f32 %v389, %v396
    %v398 = vmul.f32 %v390, %v396
    %v399 = vmul.f32 %v391, %v396
    %v400 = vmul.f32 %v392, %v396
    %v401 = vlaneseq
    %v402 = vshrl.u32 %v401, 7
    %v403 = vsub.s32 5, %v402
    %v404 = vrot.slane %v96, %v403
    %v405 = vadd.f32 %v397, %v404
    %v406 = vadd.f32 %v398, %v404
    %v407 = vadd.f32 %v399, %v404
    %v408 = vadd.f32 %v400, %v404
    %v409 = vlaneseq
    %v410 = vshrl.u32 %v409, 7
    %v411 = vsub.s32 6, %v410
    %v412 = vrot.slane %v96, %v411
    %414 = vrot.lane.b32.xlu0 %v412, 32
    %v415 = vpop.permute.xlu0 %414
    %v417 = vadd.f32 %v319, %v415
    %v418 = vadd.f32 %v322, %v415
    %v419 = vadd.f32 %v327, %v415
    %v420 = vadd.f32 %v330, %v415
    %425 = vrot.lane.b32.xlu0 %v417, 96
    %v426 = vpop.permute.xlu0 %425
    %427 = vrot.lane.b32.xlu0 %v418, 96
    %v428 = vpop.permute.xlu0 %427
    %429 = vrot.lane.b32.xlu0 %v419, 96
    %v430 = vpop.permute.xlu0 %429
    %431 = vrot.lane.b32.xlu0 %v420, 96
    %v432 = vpop.permute.xlu0 %431
    %v437 = vsel %vm124, %v426, 0.0
    %438 = vadd.xlane.f32.xlu0 %v437
    %v439 = vpop.xlane.xlu0 %438
    %v440 = vsel %vm124, %v428, 0.0
    %441 = vadd.xlane.f32.xlu0 %v440
    %v442 = vpop.xlane.xlu0 %441
    %v443 = vsel %vm124, %v430, 0.0
    %444 = vadd.xlane.f32.xlu0 %v443
    %v445 = vpop.xlane.xlu0 %444
    %v446 = vsel %vm124, %v432, 0.0
    %447 = vadd.xlane.f32.xlu0 %v446
    %v448 = vpop.xlane.xlu0 %447
    %v449 = vmul.f32 %v439, %v192
    %v450 = vmul.f32 %v442, %v192
    %v451 = vmul.f32 %v445, %v192
    %v452 = vmul.f32 %v448, %v192
    %v453 = vsub.f32 %v417, %v449
    %v454 = vsub.f32 %v418, %v450
    %v455 = vsub.f32 %v419, %v451
    %v456 = vsub.f32 %v420, %v452
    %v457 = vmul.f32 %v453, %v453
    %v458 = vmul.f32 %v454, %v454
    %v459 = vmul.f32 %v455, %v455
    %v460 = vmul.f32 %v456, %v456
    %465 = vrot.lane.b32.xlu0 %v457, 96
    %v466 = vpop.permute.xlu0 %465
    %467 = vrot.lane.b32.xlu0 %v458, 96
    %v468 = vpop.permute.xlu0 %467
    %469 = vrot.lane.b32.xlu0 %v459, 96
    %v470 = vpop.permute.xlu0 %469
    %471 = vrot.lane.b32.xlu0 %v460, 96
    %v472 = vpop.permute.xlu0 %471
    %v477 = vsel %vm124, %v466, 0.0
    %478 = vadd.xlane.f32.xlu0 %v477
    %v479 = vpop.xlane.xlu0 %478
    %v480 = vsel %vm124, %v468, 0.0
    %481 = vadd.xlane.f32.xlu0 %v480
    %v482 = vpop.xlane.xlu0 %481
    %v483 = vsel %vm124, %v470, 0.0
    %484 = vadd.xlane.f32.xlu0 %v483
    %v485 = vpop.xlane.xlu0 %484
    %v486 = vsel %vm124, %v472, 0.0
    %487 = vadd.xlane.f32.xlu0 %v486
    %v488 = vpop.xlane.xlu0 %487
    %v489 = vmul.f32 %v479, %v192
    %v490 = vmul.f32 %v482, %v192
    %v491 = vmul.f32 %v485, %v192
    %v492 = vmul.f32 %v488, %v192
    %v493 = vadd.f32 %v489, 1e-12
    %v494 = vadd.f32 %v490, 1e-12
    %v495 = vadd.f32 %v491, 1e-12
    %v496 = vadd.f32 %v492, 1e-12
    %v497 = vrsqrt.pop %v493
    %v498 = vrsqrt.pop %v494
    %v499 = vrsqrt.pop %v495
    %v500 = vrsqrt.pop %v496
    %v501 = vmul.f32 %v453, %v497
    %v502 = vmul.f32 %v454, %v498
    %v503 = vmul.f32 %v455, %v499
    %v504 = vmul.f32 %v456, %v500
    %v505 = vlaneseq
    %v506 = vshrl.u32 %v505, 7
    %v507 = vsub.s32 7, %v506
    %v508 = vrot.slane %v96, %v507
    %510 = vrot.lane.b32.xlu0 %v508, 32
    %v511 = vpop.permute.xlu0 %510
    %v513 = vmul.f32 %v501, %v511
    %v514 = vmul.f32 %v502, %v511
    %v515 = vmul.f32 %v503, %v511
    %v516 = vmul.f32 %v504, %v511
    %v517 = vlaneseq
    %v518 = vshrl.u32 %v517, 7
    %v519 = vsub.s32 0, %v518
    %v520 = vrot.slane %v97, %v519
    %522 = vrot.lane.b32.xlu0 %v520, 32
    %v523 = vpop.permute.xlu0 %522
    %v525 = vadd.f32 %v513, %v523
    %v526 = vadd.f32 %v514, %v523
    %v527 = vadd.f32 %v515, %v523
    %v528 = vadd.f32 %v516, %v523
    %v529 = vadd.f32 %v245, %v405
    %v530 = vadd.f32 %v246, %v406
    %v531 = vadd.f32 %v247, %v407
    %v532 = vadd.f32 %v248, %v408
    %537 = vrot.lane.b32.xlu0 %v525, 96
    %v538 = vpop.permute.xlu0 %537
    %539 = vrot.lane.b32.xlu0 %v526, 96
    %v540 = vpop.permute.xlu0 %539
    %541 = vrot.lane.b32.xlu0 %v527, 96
    %v542 = vpop.permute.xlu0 %541
    %543 = vrot.lane.b32.xlu0 %v528, 96
    %v544 = vpop.permute.xlu0 %543
    %v549 = vadd.f32 %v529, %v538
    %v550 = vadd.f32 %v530, %v540
    %v551 = vadd.f32 %v531, %v542
    %v552 = vadd.f32 %v532, %v544
    %v553 = vld [vmem:[#allocation5] sm:$0xff]
    %v554 = vld [vmem:[#allocation5 + $0x8] sm:$0xff]
    %v555 = vld [vmem:[#allocation5 + $0x10] sm:$0xff]
    %v556 = vld [vmem:[#allocation5 + $0x18] sm:$0xff]
    %v557 = vadd.f32 %v549, %v553
    %v558 = vadd.f32 %v550, %v554
    %v559 = vadd.f32 %v551, %v555
    %v560 = vadd.f32 %v552, %v556
    %v561 = vld [vmem:[%s3] sm:$0xff]
    %v562 = vld [vmem:[%s3 + $0x8] sm:$0xff]
    %v563 = vld [vmem:[%s3 + $0x10] sm:$0xff]
    %v564 = vld [vmem:[%s3 + $0x18] sm:$0xff]
    %v565 = vadd.f32 %v557, %v561
    %v566 = vadd.f32 %v558, %v562
    %v567 = vadd.f32 %v559, %v563
    %v568 = vadd.f32 %v560, %v564
    %v569 = vsel %vm124, %v565, 0.0
    %570 = vadd.xlane.f32.xlu0 %v569
    %v571 = vpop.xlane.xlu0 %570
    %v572 = vsel %vm124, %v566, 0.0
    %573 = vadd.xlane.f32.xlu0 %v572
    %v574 = vpop.xlane.xlu0 %573
    %v575 = vsel %vm124, %v567, 0.0
    %576 = vadd.xlane.f32.xlu0 %v575
    %v577 = vpop.xlane.xlu0 %576
    %v578 = vsel %vm124, %v568, 0.0
    %579 = vadd.xlane.f32.xlu0 %v578
    %v580 = vpop.xlane.xlu0 %579
    %v581 = vmul.f32 %v571, %v192
    %v582 = vmul.f32 %v574, %v192
    %v583 = vmul.f32 %v577, %v192
    %v584 = vmul.f32 %v580, %v192
    %v585 = vsub.f32 %v565, %v581
    %v586 = vsub.f32 %v566, %v582
    %v587 = vsub.f32 %v567, %v583
    %v588 = vsub.f32 %v568, %v584
    %v589 = vmul.f32 %v585, %v585
    %v590 = vmul.f32 %v586, %v586
    %v591 = vmul.f32 %v587, %v587
    %v592 = vmul.f32 %v588, %v588
    %v593 = vsel %vm124, %v589, 0.0
    %594 = vadd.xlane.f32.xlu0 %v593
    %v595 = vpop.xlane.xlu0 %594
    %v596 = vsel %vm124, %v590, 0.0
    %597 = vadd.xlane.f32.xlu0 %v596
    %v598 = vpop.xlane.xlu0 %597
    %v599 = vsel %vm124, %v591, 0.0
    %600 = vadd.xlane.f32.xlu0 %v599
    %v601 = vpop.xlane.xlu0 %600
    %v602 = vsel %vm124, %v592, 0.0
    %603 = vadd.xlane.f32.xlu0 %v602
    %v604 = vpop.xlane.xlu0 %603
    %v605 = vmul.f32 %v595, %v192
    %v606 = vmul.f32 %v598, %v192
    %v607 = vmul.f32 %v601, %v192
    %v608 = vmul.f32 %v604, %v192
    %v609 = vadd.f32 %v605, 1e-12
    %v610 = vadd.f32 %v606, 1e-12
    %v611 = vadd.f32 %v607, 1e-12
    %v612 = vadd.f32 %v608, 1e-12
    %v613 = vrsqrt.pop %v609
    %v614 = vrsqrt.pop %v610
    %v615 = vrsqrt.pop %v611
    %v616 = vrsqrt.pop %v612
    %v617 = vmul.f32 %v585, %v613
    %v618 = vmul.f32 %v586, %v614
    %v619 = vmul.f32 %v587, %v615
    %v620 = vmul.f32 %v588, %v616
    %v621 = vlaneseq
    %v622 = vshrl.u32 %v621, 7
    %v623 = vsub.s32 1, %v622
    %v624 = vrot.slane %v97, %v623
    %v625 = vmul.f32 %v617, %v624
    %v626 = vmul.f32 %v618, %v624
    %v627 = vmul.f32 %v619, %v624
    %v628 = vmul.f32 %v620, %v624
    %v629 = vlaneseq
    %v630 = vshrl.u32 %v629, 7
    %v631 = vsub.s32 2, %v630
    %v632 = vrot.slane %v97, %v631
    %v633 = vadd.f32 %v625, %v632
    %v634 = vadd.f32 %v626, %v632
    %v635 = vadd.f32 %v627, %v632
    %v636 = vadd.f32 %v628, %v632
    %637 = vst.msk [vmem:[#allocation11] sm:$0xff] %vm124, %v633
    %638 = vst.msk [vmem:[#allocation11 + $0x8] sm:$0xff] %vm124, %v634
    %639 = vst.msk [vmem:[#allocation11 + $0x10] sm:$0xff] %vm124, %v635
    %640 = vst.msk [vmem:[#allocation11 + $0x18] sm:$0xff] %vm124, %v636
    // Predicated region
    $region50: #{tpu_custom_call.1} parent=1 // pred_check
      _
    $region51: #{tpu_custom_call.1} parent=1 // pred_check_branch
      %642 = sbr.rel (0) target = $region53
    $region52: #{tpu_custom_call.1} parent=1 // pred_region
      %s644 = ssub.s32 512, 384
      %645 = vsyncadd [#allocation4], %s644
      %s646 = sshll.u32 [#allocation11], 4
      %s647 = int_to_ptr.vmem [resolvable:$true] %s646
      %652 = dma.vmem_to_hbm [thread:$0]  %s647, 384, %s7, [#allocation4], 128, 128, 8
    $region53: #{tpu_custom_call.1} parent=1 // pred_fallthru
      _
    // Predicated region
    $region54: #{tpu_custom_call.1} parent=1 // pred_check
      _
    $region55: #{tpu_custom_call.1} parent=1 // pred_check_branch
      %654 = sbr.rel (0) target = $region57
    $region56: #{tpu_custom_call.1} parent=1 // pred_region
      %655 = dma.done [#allocation4], 512
    $region57: #{tpu_custom_call.1} parent=1 // pred_fallthru
      _
    %656 = vsyncpa [#allocation3], 1
    %657 = vsyncpa [#allocation6], 1
    %658 = vsyncpa [#allocation9], 1
    %659 = vsyncpa [#allocation4], 1

// kernel: tpu_custom_call.1
$region0: #{tpu_custom_call.1}
  #allocation0 [shape = 'u32[]', space=smem, size = 0x4, offset = 0x4, fixed_abs, tag = 'smem constant byte address 0x4 - core index']
  #allocation1 [shape = 'u32[144,128]{1,0:T(1,128)}', space=vmem, size = 0x12000, scoped, tag = 'internal scratch']
  %s0 = inlined_call_operand.hbm [shape: f32[18,32], index: 0, kind: input, shape index: {}]
  %s1 = inlined_call_operand.vmem [shape: bf16[18,13], index: 1, kind: input, shape index: {}]
  %s2 = inlined_call_operand.hbm [shape: f32[18,32], index: 2, kind: input, shape index: {}]
  %s3 = inlined_call_operand.vmem [shape: f32[18,32], index: 3, kind: input, shape index: {}]
  %s4 = inlined_call_operand.hbm [shape: bf16[32,32], index: 4, kind: input, shape index: {}]
  %s5 = inlined_call_operand.hbm [shape: bf16[13,64], index: 5, kind: input, shape index: {}]
  %s6 = inlined_call_operand.hbm [shape: f32[16,32], index: 6, kind: input, shape index: {}]
  %s7 = inlined_call_operand.hbm [shape: f32[18,32], index: 7, kind: output, shape index: {}]
  %s8 = sld [smem:[#allocation0]]
  $region58: #{tpu_custom_call.1} parent=0
    _
  %s10 = ssub.s32 1, %s8
  %s11 = scalar_select 0, %s10, %s8
  $region1: #{tpu_custom_call.1} parent=0
    #allocation2 [shape = 'u8[16384]{0}', space=vmem, size = 0x4000, scoped, tag = 'input window, operand 0, single buffered']
    #allocation3 [shape = 's32[1]{0}', space=sflag, size = 0x4, scoped, tag = 'scoped memory for tpu_custom_call.1']
    #allocation4 [shape = 's32[1]{0}', space=sflag, size = 0x4, scoped, tag = 'scoped memory for tpu_custom_call.1']
    #allocation5 [shape = 'u8[16384]{0}', space=vmem, size = 0x4000, scoped, tag = 'input window, operand 2, single buffered']
    #allocation6 [shape = 's32[1]{0}', space=sflag, size = 0x4, scoped, tag = 'scoped memory for tpu_custom_call.1']
    #allocation7 [shape = 'u8[8192]{0}', space=vmem, size = 0x2000, scoped, tag = 'input window, operand 4, single buffered']
    #allocation8 [shape = 'u8[4096]{0}', space=vmem, size = 0x1000, scoped, tag = 'input window, operand 5, single buffered']
    #allocation9 [shape = 's32[1]{0}', space=sflag, size = 0x4, scoped, tag = 'scoped memory for tpu_custom_call.1']
    #allocation10 [shape = 'u8[8192]{0}', space=vmem, size = 0x2000, scoped, tag = 'input window, operand 6, single buffered']
    #allocation11 [shape = 'u8[16384]{0}', space=vmem, size = 0x4000, scoped, tag = 'output window, operand 0, single buffered']
    %12 = vsyncpa [#allocation3], 0
    %13 = vsyncpa [#allocation6], 0
    %14 = vsyncpa [#allocation9], 0
    %15 = vsyncpa [#allocation4], 0
    // Predicated region
    $region2: #{tpu_custom_call.1} parent=1 // pred_check
      _
    $region3: #{tpu_custom_call.1} parent=1 // pred_check_branch
      %17 = sbr.rel (0) target = $region5
    $region4: #{tpu_custom_call.1} parent=1 // pred_region
      %s19 = ssub.s32 512, 384
      %20 = vsyncadd [#allocation3], %s19
      %s21 = sshll.u32 [#allocation2], 4
      %s22 = int_to_ptr.vmem [resolvable:$true] %s21
      %27 = dma.hbm_to_vmem [thread:$0]  %s0, 384, %s22, [#allocation3], 128, 128, 8
    $region5: #{tpu_custom_call.1} parent=1 // pred_fallthru
      _
    // Predicated region
    $region6: #{tpu_custom_call.1} parent=1 // pred_check
      _
    $region7: #{tpu_custom_call.1} parent=1 // pred_check_branch
      %29 = sbr.rel (0) target = $region9
    $region8: #{tpu_custom_call.1} parent=1 // pred_region
      _
    $region9: #{tpu_custom_call.1} parent=1 // pred_fallthru
      _
    // Predicated region
    $region10: #{tpu_custom_call.1} parent=1 // pred_check
      _
    $region11: #{tpu_custom_call.1} parent=1 // pred_check_branch
      %31 = sbr.rel (0) target = $region13
    $region12: #{tpu_custom_call.1} parent=1 // pred_region
      %s33 = ssub.s32 512, 384
      %34 = vsyncadd [#allocation6], %s33
      %s35 = sshll.u32 [#allocation5], 4
      %s36 = int_to_ptr.vmem [resolvable:$true] %s35
      %41 = dma.hbm_to_vmem [thread:$0]  %s2, 384, %s36, [#allocation6], 128, 128, 8
    $region13: #{tpu_custom_call.1} parent=1 // pred_fallthru
      _
    // Predicated region
    $region14: #{tpu_custom_call.1} parent=1 // pred_check
      _
    $region15: #{tpu_custom_call.1} parent=1 // pred_check_branch
      %43 = sbr.rel (0) target = $region17
    $region16: #{tpu_custom_call.1} parent=1 // pred_region
      _
    $region17: #{tpu_custom_call.1} parent=1 // pred_fallthru
      _
    // Predicated region
    $region18: #{tpu_custom_call.1} parent=1 // pred_check
      _
    $region19: #{tpu_custom_call.1} parent=1 // pred_check_branch
      %45 = sbr.rel (0) target = $region21
    $region20: #{tpu_custom_call.1} parent=1 // pred_region
      %s47 = ssub.s32 256, 256
      %48 = vsyncadd [#allocation6], %s47
      %s49 = sshll.u32 [#allocation7], 4
      %s50 = int_to_ptr.vmem [resolvable:$true] %s49
      %55 = dma.hbm_to_vmem [thread:$0]  %s4, 256, %s50, [#allocation6], 64, 64, 4
    $region21: #{tpu_custom_call.1} parent=1 // pred_fallthru
      _
    // Predicated region
    $region22: #{tpu_custom_call.1} parent=1 // pred_check
      _
    $region23: #{tpu_custom_call.1} parent=1 // pred_check_branch
      %57 = sbr.rel (0) target = $region25
    $region24: #{tpu_custom_call.1} parent=1 // pred_region
      %s59 = ssub.s32 128, 128
      %60 = vsyncadd [#allocation9], %s59
      %s61 = sshll.u32 [#allocation8], 4
      %s62 = int_to_ptr.vmem [resolvable:$true] %s61
      %67 = dma.hbm_to_vmem [thread:$0]  %s5, 128, %s62, [#allocation9], 64, 64, 4
    $region25: #{tpu_custom_call.1} parent=1 // pred_fallthru
      _
    // Predicated region
    $region26: #{tpu_custom_call.1} parent=1 // pred_check
      _
    $region27: #{tpu_custom_call.1} parent=1 // pred_check_branch
      %69 = sbr.rel (0) target = $region29
    $region28: #{tpu_custom_call.1} parent=1 // pred_region
      %s71 = ssub.s32 256, 256
      %72 = vsyncadd [#allocation9], %s71
      %s73 = sshll.u32 [#allocation10], 4
      %s74 = int_to_ptr.vmem [resolvable:$true] %s73
      %79 = dma.hbm_to_vmem [thread:$0]  %s6, 256, %s74, [#allocation9], 128, 128, 8
    $region29: #{tpu_custom_call.1} parent=1 // pred_fallthru
      _
    // Predicated region
    $region30: #{tpu_custom_call.1} parent=1 // pred_check
      _
    $region31: #{tpu_custom_call.1} parent=1 // pred_check_branch
      %81 = sbr.rel (0) target = $region33
    $region32: #{tpu_custom_call.1} parent=1 // pred_region
      %82 = dma.done [#allocation3], 512
    $region33: #{tpu_custom_call.1} parent=1 // pred_fallthru
      _
    // Predicated region
    $region34: #{tpu_custom_call.1} parent=1 // pred_check
      _
    $region35: #{tpu_custom_call.1} parent=1 // pred_check_branch
      %84 = sbr.rel (0) target = $region37
    $region36: #{tpu_custom_call.1} parent=1 // pred_region
      %85 = dma.done [#allocation6], 512
    $region37: #{tpu_custom_call.1} parent=1 // pred_fallthru
      _
    // Predicated region
    $region38: #{tpu_custom_call.1} parent=1 // pred_check
      _
    $region39: #{tpu_custom_call.1} parent=1 // pred_check_branch
      %87 = sbr.rel (0) target = $region41
    $region40: #{tpu_custom_call.1} parent=1 // pred_region
      %88 = dma.done [#allocation6], 256
    $region41: #{tpu_custom_call.1} parent=1 // pred_fallthru
      _
    // Predicated region
    $region42: #{tpu_custom_call.1} parent=1 // pred_check
      _
    $region43: #{tpu_custom_call.1} parent=1 // pred_check_branch
      %90 = sbr.rel (0) target = $region45
    $region44: #{tpu_custom_call.1} parent=1 // pred_region
      %91 = dma.done [#allocation9], 128
    $region45: #{tpu_custom_call.1} parent=1 // pred_fallthru
      _
    // Predicated region
    $region46: #{tpu_custom_call.1} parent=1 // pred_check
      _
    $region47: #{tpu_custom_call.1} parent=1 // pred_check_branch
      %93 = sbr.rel (0) target = $region49
    $region48: #{tpu_custom_call.1} parent=1 // pred_region
      %94 = dma.done [#allocation9], 256
    $region49: #{tpu_custom_call.1} parent=1 // pred_fallthru
      _
    %v96 = vld [vmem:[#allocation10] sm:$0xff]
    %v97 = vld [vmem:[#allocation10 + $0x8] sm:$0xff]
    %v98 = vld [vmem:[#allocation2] sm:$0xff]
    %v99 = vld [vmem:[#allocation2 + $0x8] sm:$0xff]
    %v100 = vld [vmem:[#allocation2 + $0x10] sm:$0xff]
    %v101 = vld [vmem:[#allocation2 + $0x18] sm:$0xff]
    %v102 = vpack.c.bf16 %v99, %v98
    %v103 = vpack.c.bf16 %v101, %v100
    %v104 = vld [vmem:[#allocation7] sm:$0xf]
    %v105 = vld [vmem:[#allocation7 + $0x4] sm:$0xf]
    %v106 = vld [vmem:[#allocation7 + $0x8] sm:$0xf]
    %v107 = vld [vmem:[#allocation7 + $0xc] sm:$0xf]
    %v108 = vlaneseq
    %v109 = vshrl.u32 %v108, 7
    %v110 = vsub.s32 0, %v109
    %v111 = vrot.slane %v96, %v110
    %v116 = vunpack.c.l.b16 %v104
    %v117 = vunpack.c.l.b16 %v105
    %v118 = vunpack.c.l.b16 %v106
    %v119 = vunpack.c.l.b16 %v107
    %v120 = vpack.c.b16 %v117, %v116
    %v121 = vpack.c.b16 %v119, %v118
    %vm124 = vcmask 261120
    %v126 = vsel %vm124, %v102, 0
    %v129 = vsel %vm124, %v103, 0
    %131 = vmatprep.subr.bf16.mxu0 0
    %132 = vmatpush1.bf16.msra.mxu0 0
    %133 = vmatprep.subr.bf16.mxu0 0
    %134 = vmatpush1.bf16.msra.mxu0 0
    %135 = vmatprep.subr.bf16.mxu0 0
    %136 = vmatpush1.bf16.msra.mxu0 0
    %137 = vmatprep.subr.bf16.mxu0 0
    %138 = vmatpush1.bf16.msra.mxu0 0
    %139 = vmatprep.subr.bf16.mxu0 0
    %140 = vmatpush1.bf16.msra.mxu0 0
    %141 = vmatprep.subr.bf16.mxu0 0
    %142 = vmatpush1.bf16.msra.mxu0 0
    %143 = vmatprep.subr.bf16.mxu0 0
    %144 = vmatpush1.bf16.msra.mxu0 %v121
    %145 = vmatprep.subr.bf16.mxu0 0
    %146 = vmatpush1.bf16.msra.mxu0 %v120
    %147 = vmatprep.subr.bf16.mxu0 0
    %148 = vmatpush2.bf16.msra.mxu0 0
    %149 = vmatprep.subr.bf16.mxu0 0
    %150 = vmatpush2.bf16.msra.mxu0 0
    %151 = vmatprep.subr.bf16.mxu0 0
    %152 = vmatpush2.bf16.msra.mxu0 0
    %153 = vmatprep.subr.bf16.mxu0 0
    %154 = vmatpush2.bf16.msra.mxu0 0
    %155 = vmatprep.subr.bf16.mxu0 0
    %156 = vmatpush2.bf16.msra.mxu0 0
    %157 = vmatprep.subr.bf16.mxu0 0
    %158 = vmatpush2.bf16.msra.mxu0 0
    %159 = vmatprep.subr.bf16.mxu0 0
    %160 = vmatpush2.bf16.msra.mxu0 0
    %161 = vmatprep.subr.bf16.mxu0 0
    %162 = vmatpush2.bf16.msra.mxu0 0
    %163 = vmatprep.mubr.bf16.mxu0 0
    %164 = vmatmul.mubr.bf16.gmra.mxu0 %v126
    %v165 = vpop.f32.mrf.mxu0
    %v166 = vadd.f32 %v111, %v165
    %v167 = vpop.f32.mrf.mxu0
    %v168 = vpop.f32.mrf.mxu0
    %v169 = vadd.f32 %v111, %v168
    %v170 = vpop.f32.mrf.mxu0
    %171 = vmatprep.mubr.bf16.mxu0 0
    %172 = vmatmul.mubr.bf16.gmra.mxu0 %v129
    %v173 = vpop.f32.mrf.mxu0
    %v174 = vadd.f32 %v111, %v173
    %v175 = vpop.f32.mrf.mxu0
    %v176 = vpop.f32.mrf.mxu0
    %v177 = vadd.f32 %v111, %v176
    %v178 = vpop.f32.mrf.mxu0
    %179 = vdwg.mxu0
    %v180 = vsel %vm124, %v166, 0.0
    %181 = vadd.xlane.f32.xlu0 %v180
    %v182 = vpop.xlane.xlu0 %181
    %v183 = vsel %vm124, %v169, 0.0
    %184 = vadd.xlane.f32.xlu0 %v183
    %v185 = vpop.xlane.xlu0 %184
    %v186 = vsel %vm124, %v174, 0.0
    %187 = vadd.xlane.f32.xlu0 %v186
    %v188 = vpop.xlane.xlu0 %187
    %v189 = vsel %vm124, %v177, 0.0
    %190 = vadd.xlane.f32.xlu0 %v189
    %v191 = vpop.xlane.xlu0 %190
    %v192 = vrcp.pop 32.0
    %v193 = vmul.f32 %v182, %v192
    %v194 = vmul.f32 %v185, %v192
    %v195 = vmul.f32 %v188, %v192
    %v196 = vmul.f32 %v191, %v192
    %v197 = vsub.f32 %v166, %v193
    %v198 = vsub.f32 %v169, %v194
    %v199 = vsub.f32 %v174, %v195
    %v200 = vsub.f32 %v177, %v196
    %v201 = vmul.f32 %v197, %v197
    %v202 = vmul.f32 %v198, %v198
    %v203 = vmul.f32 %v199, %v199
    %v204 = vmul.f32 %v200, %v200
    %v205 = vsel %vm124, %v201, 0.0
    %206 = vadd.xlane.f32.xlu0 %v205
    %v207 = vpop.xlane.xlu0 %206
    %v208 = vsel %vm124, %v202, 0.0
    %209 = vadd.xlane.f32.xlu0 %v208
    %v210 = vpop.xlane.xlu0 %209
    %v211 = vsel %vm124, %v203, 0.0
    %212 = vadd.xlane.f32.xlu0 %v211
    %v213 = vpop.xlane.xlu0 %212
    %v214 = vsel %vm124, %v204, 0.0
    %215 = vadd.xlane.f32.xlu0 %v214
    %v216 = vpop.xlane.xlu0 %215
    %v217 = vmul.f32 %v207, %v192
    %v218 = vmul.f32 %v210, %v192
    %v219 = vmul.f32 %v213, %v192
    %v220 = vmul.f32 %v216, %v192
    %v221 = vadd.f32 %v217, 1e-12
    %v222 = vadd.f32 %v218, 1e-12
    %v223 = vadd.f32 %v219, 1e-12
    %v224 = vadd.f32 %v220, 1e-12
    %v225 = vrsqrt.pop %v221
    %v226 = vrsqrt.pop %v222
    %v227 = vrsqrt.pop %v223
    %v228 = vrsqrt.pop %v224
    %v229 = vmul.f32 %v197, %v225
    %v230 = vmul.f32 %v198, %v226
    %v231 = vmul.f32 %v199, %v227
    %v232 = vmul.f32 %v200, %v228
    %v233 = vlaneseq
    %v234 = vshrl.u32 %v233, 7
    %v235 = vsub.s32 1, %v234
    %v236 = vrot.slane %v96, %v235
    %v237 = vmul.f32 %v229, %v236
    %v238 = vmul.f32 %v230, %v236
    %v239 = vmul.f32 %v231, %v236
    %v240 = vmul.f32 %v232, %v236
    %v241 = vlaneseq
    %v242 = vshrl.u32 %v241, 7
    %v243 = vsub.s32 2, %v242
    %v244 = vrot.slane %v96, %v243
    %v245 = vadd.f32 %v237, %v244
    %v246 = vadd.f32 %v238, %v244
    %v247 = vadd.f32 %v239, %v244
    %v248 = vadd.f32 %v240, %v244
    %v249 = vld [vmem:[%s1] sm:$0xf]
    %v250 = vld [vmem:[%s1 + $0x4] sm:$0xf]
    %v251 = vld [vmem:[%s1 + $0x8] sm:$0xf]
    %v252 = vld [vmem:[%s1 + $0xc] sm:$0xf]
    %v253 = vld [vmem:[#allocation8] sm:$0xf]
    %v254 = vld [vmem:[#allocation8 + $0x4] sm:$0x7]
    %v259 = vunpack.c.l.b16 %v249
    %v260 = vunpack.c.l.b16 %v250
    %v261 = vunpack.c.l.b16 %v251
    %v262 = vunpack.c.l.b16 %v252
    %v263 = vpack.c.b16 %v260, %v259
    %v264 = vpack.c.b16 %v262, %v261
    %v267 = vunpack.c.l.b16 %v253
    %v268 = vunpack.c.l.b16 %v254
    %v269 = vpack.c.b16 %v268, %v267
    %vm270 = vcmask 105472
    %v272 = vsel %vm270, %v263, 0
    %v275 = vsel %vm270, %v264, 0
    %vm277 = vcmask 1045504
    %vm278 = vcmask 1046528
    %v279 = vsel %vm277, 4294967295, 65535
    %v280 = vsel %vm278, %v279, 0
    %v282 = vand.u32 %v269, %v280
    %284 = vmatprep.subr.bf16.mxu0 0
    %285 = vmatpush1.bf16.msra.mxu0 0
    %286 = vmatprep.subr.bf16.mxu0 0
    %287 = vmatpush1.bf16.msra.mxu0 0
    %288 = vmatprep.subr.bf16.mxu0 0
    %289 = vmatpush1.bf16.msra.mxu0 0
    %290 = vmatprep.subr.bf16.mxu0 0
    %291 = vmatpush1.bf16.msra.mxu0 0
    %292 = vmatprep.subr.bf16.mxu0 0
    %293 = vmatpush1.bf16.msra.mxu0 0
    %294 = vmatprep.subr.bf16.mxu0 0
    %295 = vmatpush1.bf16.msra.mxu0 0
    %296 = vmatprep.subr.bf16.mxu0 0
    %297 = vmatpush1.bf16.msra.mxu0 0
    %298 = vmatprep.subr.bf16.mxu0 0
    %299 = vmatpush1.bf16.msra.mxu0 %v282
    %300 = vmatprep.subr.bf16.mxu0 0
    %301 = vmatpush2.bf16.msra.mxu0 0
    %302 = vmatprep.subr.bf16.mxu0 0
    %303 = vmatpush2.bf16.msra.mxu0 0
    %304 = vmatprep.subr.bf16.mxu0 0
    %305 = vmatpush2.bf16.msra.mxu0 0
    %306 = vmatprep.subr.bf16.mxu0 0
    %307 = vmatpush2.bf16.msra.mxu0 0
    %308 = vmatprep.subr.bf16.mxu0 0
    %309 = vmatpush2.bf16.msra.mxu0 0
    %310 = vmatprep.subr.bf16.mxu0 0
    %311 = vmatpush2.bf16.msra.mxu0 0
    %312 = vmatprep.subr.bf16.mxu0 0
    %313 = vmatpush2.bf16.msra.mxu0 0
    %314 = vmatprep.subr.bf16.mxu0 0
    %315 = vmatpush2.bf16.msra.mxu0 0
    %316 = vmatprep.mubr.bf16.mxu0 0
    %317 = vmatmul.mubr.bf16.gmra.mxu0 %v272
    %v318 = vpop.f32.mrf.mxu0
    %v319 = vadd.f32 0.0, %v318
    %v320 = vpop.f32.mrf.mxu0
    %v321 = vpop.f32.mrf.mxu0
    %v322 = vadd.f32 0.0, %v321
    %v323 = vpop.f32.mrf.mxu0
    %324 = vmatprep.mubr.bf16.mxu0 0
    %325 = vmatmul.mubr.bf16.gmra.mxu0 %v275
    %v326 = vpop.f32.mrf.mxu0
    %v327 = vadd.f32 0.0, %v326
    %v328 = vpop.f32.mrf.mxu0
    %v329 = vpop.f32.mrf.mxu0
    %v330 = vadd.f32 0.0, %v329
    %v331 = vpop.f32.mrf.mxu0
    %332 = vdwg.mxu0
    %v333 = vlaneseq
    %v334 = vshrl.u32 %v333, 7
    %v335 = vsub.s32 3, %v334
    %v336 = vrot.slane %v96, %v335
    %v337 = vadd.f32 %v319, %v336
    %v338 = vadd.f32 %v322, %v336
    %v339 = vadd.f32 %v327, %v336
    %v340 = vadd.f32 %v330, %v336
    %v341 = vsel %vm124, %v337, 0.0
    %342 = vadd.xlane.f32.xlu0 %v341
    %v343 = vpop.xlane.xlu0 %342
    %v344 = vsel %vm124, %v338, 0.0
    %345 = vadd.xlane.f32.xlu0 %v344
    %v346 = vpop.xlane.xlu0 %345
    %v347 = vsel %vm124, %v339, 0.0
    %348 = vadd.xlane.f32.xlu0 %v347
    %v349 = vpop.xlane.xlu0 %348
    %v350 = vsel %vm124, %v340, 0.0
    %351 = vadd.xlane.f32.xlu0 %v350
    %v352 = vpop.xlane.xlu0 %351
    %v353 = vmul.f32 %v343, %v192
    %v354 = vmul.f32 %v346, %v192
    %v355 = vmul.f32 %v349, %v192
    %v356 = vmul.f32 %v352, %v192
    %v357 = vsub.f32 %v337, %v353
    %v358 = vsub.f32 %v338, %v354
    %v359 = vsub.f32 %v339, %v355
    %v360 = vsub.f32 %v340, %v356
    %v361 = vmul.f32 %v357, %v357
    %v362 = vmul.f32 %v358, %v358
    %v363 = vmul.f32 %v359, %v359
    %v364 = vmul.f32 %v360, %v360
    %v365 = vsel %vm124, %v361, 0.0
    %366 = vadd.xlane.f32.xlu0 %v365
    %v367 = vpop.xlane.xlu0 %366
    %v368 = vsel %vm124, %v362, 0.0
    %369 = vadd.xlane.f32.xlu0 %v368
    %v370 = vpop.xlane.xlu0 %369
    %v371 = vsel %vm124, %v363, 0.0
    %372 = vadd.xlane.f32.xlu0 %v371
    %v373 = vpop.xlane.xlu0 %372
    %v374 = vsel %vm124, %v364, 0.0
    %375 = vadd.xlane.f32.xlu0 %v374
    %v376 = vpop.xlane.xlu0 %375
    %v377 = vmul.f32 %v367, %v192
    %v378 = vmul.f32 %v370, %v192
    %v379 = vmul.f32 %v373, %v192
    %v380 = vmul.f32 %v376, %v192
    %v381 = vadd.f32 %v377, 1e-12
    %v382 = vadd.f32 %v378, 1e-12
    %v383 = vadd.f32 %v379, 1e-12
    %v384 = vadd.f32 %v380, 1e-12
    %v385 = vrsqrt.pop %v381
    %v386 = vrsqrt.pop %v382
    %v387 = vrsqrt.pop %v383
    %v388 = vrsqrt.pop %v384
    %v389 = vmul.f32 %v357, %v385
    %v390 = vmul.f32 %v358, %v386
    %v391 = vmul.f32 %v359, %v387
    %v392 = vmul.f32 %v360, %v388
    %v393 = vlaneseq
    %v394 = vshrl.u32 %v393, 7
    %v395 = vsub.s32 4, %v394
    %v396 = vrot.slane %v96, %v395
    %v397 = vmul.f32 %v389, %v396
    %v398 = vmul.f32 %v390, %v396
    %v399 = vmul.f32 %v391, %v396
    %v400 = vmul.f32 %v392, %v396
    %v401 = vlaneseq
    %v402 = vshrl.u32 %v401, 7
    %v403 = vsub.s32 5, %v402
    %v404 = vrot.slane %v96, %v403
    %v405 = vadd.f32 %v397, %v404
    %v406 = vadd.f32 %v398, %v404
    %v407 = vadd.f32 %v399, %v404
    %v408 = vadd.f32 %v400, %v404
    %v409 = vlaneseq
    %v410 = vshrl.u32 %v409, 7
    %v411 = vsub.s32 6, %v410
    %v412 = vrot.slane %v96, %v411
    %414 = vrot.lane.b32.xlu0 %v412, 32
    %v415 = vpop.permute.xlu0 %414
    %v417 = vadd.f32 %v319, %v415
    %v418 = vadd.f32 %v322, %v415
    %v419 = vadd.f32 %v327, %v415
    %v420 = vadd.f32 %v330, %v415
    %425 = vrot.lane.b32.xlu0 %v417, 96
    %v426 = vpop.permute.xlu0 %425
    %427 = vrot.lane.b32.xlu0 %v418, 96
    %v428 = vpop.permute.xlu0 %427
    %429 = vrot.lane.b32.xlu0 %v419, 96
    %v430 = vpop.permute.xlu0 %429
    %431 = vrot.lane.b32.xlu0 %v420, 96
    %v432 = vpop.permute.xlu0 %431
    %v437 = vsel %vm124, %v426, 0.0
    %438 = vadd.xlane.f32.xlu0 %v437
    %v439 = vpop.xlane.xlu0 %438
    %v440 = vsel %vm124, %v428, 0.0
    %441 = vadd.xlane.f32.xlu0 %v440
    %v442 = vpop.xlane.xlu0 %441
    %v443 = vsel %vm124, %v430, 0.0
    %444 = vadd.xlane.f32.xlu0 %v443
    %v445 = vpop.xlane.xlu0 %444
    %v446 = vsel %vm124, %v432, 0.0
    %447 = vadd.xlane.f32.xlu0 %v446
    %v448 = vpop.xlane.xlu0 %447
    %v449 = vmul.f32 %v439, %v192
    %v450 = vmul.f32 %v442, %v192
    %v451 = vmul.f32 %v445, %v192
    %v452 = vmul.f32 %v448, %v192
    %v453 = vsub.f32 %v417, %v449
    %v454 = vsub.f32 %v418, %v450
    %v455 = vsub.f32 %v419, %v451
    %v456 = vsub.f32 %v420, %v452
    %v457 = vmul.f32 %v453, %v453
    %v458 = vmul.f32 %v454, %v454
    %v459 = vmul.f32 %v455, %v455
    %v460 = vmul.f32 %v456, %v456
    %465 = vrot.lane.b32.xlu0 %v457, 96
    %v466 = vpop.permute.xlu0 %465
    %467 = vrot.lane.b32.xlu0 %v458, 96
    %v468 = vpop.permute.xlu0 %467
    %469 = vrot.lane.b32.xlu0 %v459, 96
    %v470 = vpop.permute.xlu0 %469
    %471 = vrot.lane.b32.xlu0 %v460, 96
    %v472 = vpop.permute.xlu0 %471
    %v477 = vsel %vm124, %v466, 0.0
    %478 = vadd.xlane.f32.xlu0 %v477
    %v479 = vpop.xlane.xlu0 %478
    %v480 = vsel %vm124, %v468, 0.0
    %481 = vadd.xlane.f32.xlu0 %v480
    %v482 = vpop.xlane.xlu0 %481
    %v483 = vsel %vm124, %v470, 0.0
    %484 = vadd.xlane.f32.xlu0 %v483
    %v485 = vpop.xlane.xlu0 %484
    %v486 = vsel %vm124, %v472, 0.0
    %487 = vadd.xlane.f32.xlu0 %v486
    %v488 = vpop.xlane.xlu0 %487
    %v489 = vmul.f32 %v479, %v192
    %v490 = vmul.f32 %v482, %v192
    %v491 = vmul.f32 %v485, %v192
    %v492 = vmul.f32 %v488, %v192
    %v493 = vadd.f32 %v489, 1e-12
    %v494 = vadd.f32 %v490, 1e-12
    %v495 = vadd.f32 %v491, 1e-12
    %v496 = vadd.f32 %v492, 1e-12
    %v497 = vrsqrt.pop %v493
    %v498 = vrsqrt.pop %v494
    %v499 = vrsqrt.pop %v495
    %v500 = vrsqrt.pop %v496
    %v501 = vmul.f32 %v453, %v497
    %v502 = vmul.f32 %v454, %v498
    %v503 = vmul.f32 %v455, %v499
    %v504 = vmul.f32 %v456, %v500
    %v505 = vlaneseq
    %v506 = vshrl.u32 %v505, 7
    %v507 = vsub.s32 7, %v506
    %v508 = vrot.slane %v96, %v507
    %510 = vrot.lane.b32.xlu0 %v508, 32
    %v511 = vpop.permute.xlu0 %510
    %v513 = vmul.f32 %v501, %v511
    %v514 = vmul.f32 %v502, %v511
    %v515 = vmul.f32 %v503, %v511
    %v516 = vmul.f32 %v504, %v511
    %v517 = vlaneseq
    %v518 = vshrl.u32 %v517, 7
    %v519 = vsub.s32 0, %v518
    %v520 = vrot.slane %v97, %v519
    %522 = vrot.lane.b32.xlu0 %v520, 32
    %v523 = vpop.permute.xlu0 %522
    %v525 = vadd.f32 %v513, %v523
    %v526 = vadd.f32 %v514, %v523
    %v527 = vadd.f32 %v515, %v523
    %v528 = vadd.f32 %v516, %v523
    %v529 = vadd.f32 %v245, %v405
    %v530 = vadd.f32 %v246, %v406
    %v531 = vadd.f32 %v247, %v407
    %v532 = vadd.f32 %v248, %v408
    %537 = vrot.lane.b32.xlu0 %v525, 96
    %v538 = vpop.permute.xlu0 %537
    %539 = vrot.lane.b32.xlu0 %v526, 96
    %v540 = vpop.permute.xlu0 %539
    %541 = vrot.lane.b32.xlu0 %v527, 96
    %v542 = vpop.permute.xlu0 %541
    %543 = vrot.lane.b32.xlu0 %v528, 96
    %v544 = vpop.permute.xlu0 %543
    %v549 = vadd.f32 %v529, %v538
    %v550 = vadd.f32 %v530, %v540
    %v551 = vadd.f32 %v531, %v542
    %v552 = vadd.f32 %v532, %v544
    %v553 = vld [vmem:[#allocation5] sm:$0xff]
    %v554 = vld [vmem:[#allocation5 + $0x8] sm:$0xff]
    %v555 = vld [vmem:[#allocation5 + $0x10] sm:$0xff]
    %v556 = vld [vmem:[#allocation5 + $0x18] sm:$0xff]
    %v557 = vadd.f32 %v549, %v553
    %v558 = vadd.f32 %v550, %v554
    %v559 = vadd.f32 %v551, %v555
    %v560 = vadd.f32 %v552, %v556
    %v561 = vld [vmem:[%s3] sm:$0xff]
    %v562 = vld [vmem:[%s3 + $0x8] sm:$0xff]
    %v563 = vld [vmem:[%s3 + $0x10] sm:$0xff]
    %v564 = vld [vmem:[%s3 + $0x18] sm:$0xff]
    %v565 = vadd.f32 %v557, %v561
    %v566 = vadd.f32 %v558, %v562
    %v567 = vadd.f32 %v559, %v563
    %v568 = vadd.f32 %v560, %v564
    %v569 = vsel %vm124, %v565, 0.0
    %570 = vadd.xlane.f32.xlu0 %v569
    %v571 = vpop.xlane.xlu0 %570
    %v572 = vsel %vm124, %v566, 0.0
    %573 = vadd.xlane.f32.xlu0 %v572
    %v574 = vpop.xlane.xlu0 %573
    %v575 = vsel %vm124, %v567, 0.0
    %576 = vadd.xlane.f32.xlu0 %v575
    %v577 = vpop.xlane.xlu0 %576
    %v578 = vsel %vm124, %v568, 0.0
    %579 = vadd.xlane.f32.xlu0 %v578
    %v580 = vpop.xlane.xlu0 %579
    %v581 = vmul.f32 %v571, %v192
    %v582 = vmul.f32 %v574, %v192
    %v583 = vmul.f32 %v577, %v192
    %v584 = vmul.f32 %v580, %v192
    %v585 = vsub.f32 %v565, %v581
    %v586 = vsub.f32 %v566, %v582
    %v587 = vsub.f32 %v567, %v583
    %v588 = vsub.f32 %v568, %v584
    %v589 = vmul.f32 %v585, %v585
    %v590 = vmul.f32 %v586, %v586
    %v591 = vmul.f32 %v587, %v587
    %v592 = vmul.f32 %v588, %v588
    %v593 = vsel %vm124, %v589, 0.0
    %594 = vadd.xlane.f32.xlu0 %v593
    %v595 = vpop.xlane.xlu0 %594
    %v596 = vsel %vm124, %v590, 0.0
    %597 = vadd.xlane.f32.xlu0 %v596
    %v598 = vpop.xlane.xlu0 %597
    %v599 = vsel %vm124, %v591, 0.0
    %600 = vadd.xlane.f32.xlu0 %v599
    %v601 = vpop.xlane.xlu0 %600
    %v602 = vsel %vm124, %v592, 0.0
    %603 = vadd.xlane.f32.xlu0 %v602
    %v604 = vpop.xlane.xlu0 %603
    %v605 = vmul.f32 %v595, %v192
    %v606 = vmul.f32 %v598, %v192
    %v607 = vmul.f32 %v601, %v192
    %v608 = vmul.f32 %v604, %v192
    %v609 = vadd.f32 %v605, 1e-12
    %v610 = vadd.f32 %v606, 1e-12
    %v611 = vadd.f32 %v607, 1e-12
    %v612 = vadd.f32 %v608, 1e-12
    %v613 = vrsqrt.pop %v609
    %v614 = vrsqrt.pop %v610
    %v615 = vrsqrt.pop %v611
    %v616 = vrsqrt.pop %v612
    %v617 = vmul.f32 %v585, %v613
    %v618 = vmul.f32 %v586, %v614
    %v619 = vmul.f32 %v587, %v615
    %v620 = vmul.f32 %v588, %v616
    %v621 = vlaneseq
    %v622 = vshrl.u32 %v621, 7
    %v623 = vsub.s32 1, %v622
    %v624 = vrot.slane %v97, %v623
    %v625 = vmul.f32 %v617, %v624
    %v626 = vmul.f32 %v618, %v624
    %v627 = vmul.f32 %v619, %v624
    %v628 = vmul.f32 %v620, %v624
    %v629 = vlaneseq
    %v630 = vshrl.u32 %v629, 7
    %v631 = vsub.s32 2, %v630
    %v632 = vrot.slane %v97, %v631
    %v633 = vadd.f32 %v625, %v632
    %v634 = vadd.f32 %v626, %v632
    %v635 = vadd.f32 %v627, %v632
    %v636 = vadd.f32 %v628, %v632
    %637 = vst.msk [vmem:[#allocation11] sm:$0xff] %vm124, %v633
    %638 = vst.msk [vmem:[#allocation11 + $0x8] sm:$0xff] %vm124, %v634
    %639 = vst.msk [vmem:[#allocation11 + $0x10] sm:$0xff] %vm124, %v635
    %640 = vst.msk [vmem:[#allocation11 + $0x18] sm:$0xff] %vm124, %v636
    // Predicated region
    $region50: #{tpu_custom_call.1} parent=1 // pred_check
      _
    $region51: #{tpu_custom_call.1} parent=1 // pred_check_branch
      %642 = sbr.rel (0) target = $region53
    $region52: #{tpu_custom_call.1} parent=1 // pred_region
      %s644 = ssub.s32 512, 384
      %645 = vsyncadd [#allocation4], %s644
      %s646 = sshll.u32 [#allocation11], 4
      %s647 = int_to_ptr.vmem [resolvable:$true] %s646
      %652 = dma.vmem_to_hbm [thread:$0]  %s647, 384, %s7, [#allocation4], 128, 128, 8
    $region53: #{tpu_custom_call.1} parent=1 // pred_fallthru
      _
    // Predicated region
    $region54: #{tpu_custom_call.1} parent=1 // pred_check
      _
    $region55: #{tpu_custom_call.1} parent=1 // pred_check_branch
      %654 = sbr.rel (0) target = $region57
    $region56: #{tpu_custom_call.1} parent=1 // pred_region
      %655 = dma.done [#allocation4], 512
    $region57: #{tpu_custom_call.1} parent=1 // pred_fallthru
      _
    %656 = vsyncpa [#allocation3], 1
    %657 = vsyncpa [#allocation6], 1
    %658 = vsyncpa [#allocation9], 1
    %659 = vsyncpa [#allocation4], 1

</llo_original>
